<compile_context>
chip_gen: v7x
topology: tpu7x:2x2x1
jax: 0.10.0
libtpu: 0.0.40
codegen_flags: <defaults>
</compile_context>

<pallas_src>
import functools
import math

import jax
import jax.numpy as jnp
from jax.experimental import pallas as pl
from jax.experimental.pallas import tpu as pltpu


# --------------------------------------------------------------------------
# kernel
# --------------------------------------------------------------------------
def _tanh_resnet_kernel(xt_ref, w1c_ref, wpack_ref, bpack_ref, wout_ref, out_ref,
                        *, boundary_control_type):
    f32 = jnp.float32
    bf16 = jnp.bfloat16

    xt = xt_ref[...]                       # (dim, TN) f32, batch on the lane axis
    m = wpack_ref.shape[1]

    x1 = xt[0:1, :]                        # (1, TN)
    x2 = xt[1:2, :]                        # (1, TN)

    # Biases stored as (6, m, 1): each bias already sits in lane 0, so the
    # lane-broadcast needs no cross-lane (XLU) move.
    b1 = bpack_ref[0]
    b2 = bpack_ref[1]
    b3 = bpack_ref[2]
    b4 = bpack_ref[3]
    b5 = bpack_ref[4]
    b6 = bpack_ref[5]

    def mm(k, y):
        # fc(k+2): (m, m) @ (m, TN) on the MXU with bf16 inputs and f32
        # accumulation -- single MXU pass on v5e/v6e/v7x vs. multi-pass f32xf32.
        return jnp.dot(wpack_ref[k], y.astype(bf16), preferred_element_type=f32)

    # s = (x @ Ix)^T : rows 0,1 hold x1,x2, the rest are zero.  Built as a
    # 2-term broadcast outer product with tiny (m, 1) one-hot columns: 3
    # full-tile VALU ops (vs. 5 for iota + nested selects) and no unaligned
    # sublane concat (which may not lower on all Mosaic versions).
    rid = jax.lax.broadcasted_iota(jnp.int32, (m, 1), 0)
    e0 = (rid == 0).astype(f32)            # (m, 1)
    e1 = (rid == 1).astype(f32)            # (m, 1)
    s = e0 * x1 + e1 * x2                  # (m, TN)

    # block 1 -- fc1 has K = dim = 2: VPU broadcast outer product, not the MXU.
    y = jnp.tanh(w1c_ref[0] * x1 + w1c_ref[1] * x2 + b1)
    y = jnp.tanh(mm(0, y) + b2)
    y = y + s
    s = y
    # block 2
    y = jnp.tanh(mm(1, y) + b3)
    y = jnp.tanh(mm(2, y) + b4)
    y = y + s
    s = y
    # block 3
    y = jnp.tanh(mm(3, y) + b5)
    y = jnp.tanh(mm(4, y) + b6)
    y = y + s

    # output layer (no bias): (1, m) @ (m, TN) done as a sublane reduce
    # (multiply + sum over m) instead of a degenerate M=1 MXU push.
    yout = jnp.sum(y * wout_ref[...], axis=0, keepdims=True)        # (1, TN)

    pi = math.pi
    if boundary_control_type == 'none':
        out = yout
    elif boundary_control_type == 'u_net':
        mask = x2 > 0.5 * x1 - 0.4
        const = math.exp(-5.0 * (1.0 + (-1.0 + 0.9) ** 2))
        t1 = -1.0 - 0.9 * x1
        t2 = x2 + 0.9
        base_expr = (jnp.exp(-5.0 * (x1 * x1 + t1 * t1))
                     + jnp.exp(-5.0 * (1.0 + t2 * t2))
                     - const)
        base = jnp.where(mask, f32(0.0), base_expr)
        out = (jnp.cos(-pi / 4 + pi / 4 * x1)
               * jnp.cos(-pi / 4 + pi / 4 * x2) * yout + base)
    elif boundary_control_type == 'v_net':
        out = (jnp.cos(pi / 4 + pi / 4 * x1)
               * jnp.cos(pi / 4 + pi / 4 * x2) * yout)
    else:
        # TODO(synk): 'cube' (the module's default) has no branch in the
        # original forward() and returns None; not representable as a kernel
        # output -- fall back to the raw network output.
        out = yout

    out_ref[...] = out.astype(out_ref.dtype)


# --------------------------------------------------------------------------
# tiling / launch helpers
# --------------------------------------------------------------------------
def _round_up(x, mult):
    return ((x + mult - 1) // mult) * mult


def _tensorcores_per_chip():
    # 2-TC chips (v7x, and v4/v5p "megacore") shard a "parallel" grid axis
    # across TensorCores; v5e/v6e have one TC.  Fall back to 1 if unknown.
    try:
        kind = jax.devices()[0].device_kind.lower()
    except Exception:
        return 1
    return 2 if any(t in kind for t in ('v7', '7x', 'v4', 'v5p')) else 1


def _choose_tiling(N, m, dim, tile_n_override):
    n_cores = _tensorcores_per_chip()

    # Working-set estimate: a handful of live (m, tile_n) f32 slabs (y, s,
    # matmul result, bf16 cast, ...) dominates.  Budget leaves wide headroom
    # under v7x's 64 MiB physical VMEM (32 MiB scoped default).
    slabs = 8
    budget = 24 * 1024 * 1024
    max_tile = max(128, (budget // (slabs * 4 * m)) // 128 * 128)

    if tile_n_override is not None:
        tile_n = min(max(128, (int(tile_n_override) // 128) * 128), max_tile)
        grid_n = pl.cdiv(N, tile_n)
    else:
        # One tile per TensorCore: single grid step on 1-TC v5e/v6e, two
        # balanced steps on 2-TC chips -- unless the VMEM budget forces more.
        tile_n = min(_round_up(pl.cdiv(N, n_cores), 128), max_tile)
        grid_n = pl.cdiv(N, tile_n)
        if n_cores > 1 and grid_n % n_cores:
            grid_bal = pl.cdiv(grid_n, n_cores) * n_cores
            tile_n = min(max(128, _round_up(pl.cdiv(N, grid_bal), 128)), max_tile)
            grid_n = pl.cdiv(N, tile_n)

    est = (slabs * 4 * m * tile_n                       # live (m, tile_n) f32 temporaries
           + 2 * 4 * (dim + 1) * tile_n                 # double-buffered x / out tiles
           + 2 * (2 * 5 * m * m                         # bf16 fc2..fc6 weights (x2 buffers)
                  + 4 * (dim + 6 + 1) * m * 128))       # lane-padded (., m, 1) vectors
    vmem_limit = int(min(40 * 1024 * 1024, max(4 * est, 16 * 1024 * 1024)))
    return tile_n, grid_n, vmem_limit


@functools.partial(jax.jit,
                   static_argnames=('boundary_control_type', 'tile_n', 'transpose_x'))
def _forward_jit(x, w1cols, wpack, bpack, wout, *, boundary_control_type,
                 tile_n, transpose_x):
    xt = x.T if transpose_x else x          # transpose (if any) fuses into this jit graph
    xt = xt.astype(jnp.float32)
    dim, N = xt.shape
    if dim != 2:
        raise ValueError("TanhResNet kernel hard-codes dim == 2 (matches Ix construction)")
    m = wpack.shape[1]

    tile_n, grid_n, vmem_limit = _choose_tiling(N, m, dim, tile_n)

    kernel = functools.partial(_tanh_resnet_kernel,
                               boundary_control_type=boundary_control_type)

    y = pl.pallas_call(
        kernel,
        out_shape=jax.ShapeDtypeStruct((1, N), jnp.float32),
        grid_spec=pltpu.PrefetchScalarGridSpec(
            num_scalar_prefetch=0,
            grid=(grid_n,),
            in_specs=[
                pl.BlockSpec((dim, tile_n), lambda i: (0, i)),     # x^T tile (batch on lanes)
                pl.BlockSpec((dim, m, 1), lambda i: (0, 0, 0)),    # fc1 weight columns
                pl.BlockSpec((5, m, m), lambda i: (0, 0, 0)),      # fc2..fc6 weights (bf16)
                pl.BlockSpec((6, m, 1), lambda i: (0, 0, 0)),      # biases b1..b6 (lane 0)
                pl.BlockSpec((m, 1), lambda i: (0, 0)),            # outlayer weight
            ],
            out_specs=pl.BlockSpec((1, tile_n), lambda i: (0, i)),  # lane-dense output
        ),
        compiler_params=pltpu.CompilerParams(
            dimension_semantics=("parallel",),
            vmem_limit_bytes=vmem_limit),
    )(xt, w1cols, wpack, bpack, wout)

    return y[0]     # squeeze(1); stays inside this jit (no extra dispatch)


def tanh_resnet_forward_t(xt, packed, *, boundary_control_type='none', tile_n=None):
    """Fast path: xt is (dim, N) float32 (batch on the trailing axis, cached upstream)."""
    return _forward_jit(xt, packed['w1cols'], packed['wpack'], packed['bpack'],
                        packed['wout'], boundary_control_type=boundary_control_type,
                        tile_n=tile_n, transpose_x=False)


def tanh_resnet_forward(x, packed, *, boundary_control_type='none', tile_n=None):
    """Convenience path matching the PyTorch forward signature: x is (N, dim)."""
    return _forward_jit(x, packed['w1cols'], packed['wpack'], packed['bpack'],
                        packed['wout'], boundary_control_type=boundary_control_type,
                        tile_n=tile_n, transpose_x=True)


# --------------------------------------------------------------------------
# params (PyTorch nn.Linear layout + init) and kernel packing
# --------------------------------------------------------------------------
def init_params(key, m, dim=2):
    """nn.Linear-style init: U(-1/sqrt(fan_in), 1/sqrt(fan_in)); PyTorch layout."""
    def lin(k, fan_in, fan_out, bias=True):
        bound = 1.0 / math.sqrt(fan_in)
        kw, kb = jax.random.split(k)
        w = jax.random.uniform(kw, (fan_out, fan_in), jnp.float32, -bound, bound)
        b = (jax.random.uniform(kb, (fan_out,), jnp.float32, -bound, bound)
             if bias else None)
        return w, b

    keys = jax.random.split(key, 7)
    p = {}
    p['w1'], p['b1'] = lin(keys[0], dim, m)
    for i in range(2, 7):                               # fc2..fc6
        p[f'w{i}'], p[f'b{i}'] = lin(keys[i - 1], m, m)
    p['wout'], _ = lin(keys[6], m, 1, bias=False)       # (1, m)
    return p


def pack_params(params):
    """One-time repack of weights into the kernel's layouts (done at setup, not per call)."""
    w_list = [params[f'w{i}'] for i in range(2, 7)]
    b_list = [params[f'b{i}'] for i in range(1, 7)]
    return {
        'w1cols': params['w1'].T[:, :, None].astype(jnp.float32),        # (dim, m, 1)
        'wpack': jnp.stack(w_list, axis=0).astype(jnp.bfloat16),         # (5, m, m) bf16 (MXU)
        'bpack': jnp.stack(b_list, axis=0)[:, :, None].astype(jnp.float32),  # (6, m, 1)
        'wout': params['wout'].T.astype(jnp.float32),                    # (m, 1)
    }


# --------------------------------------------------------------------------
# pure-JAX reference (mirrors the PyTorch forward, f32 HIGHEST precision)
# --------------------------------------------------------------------------
def tanh_resnet_reference(x, params, boundary_control_type='none'):
    hi = jax.lax.Precision.HIGHEST
    m = params['w1'].shape[0]
    Ix = jnp.zeros((x.shape[1], m), jnp.float32).at[0, 0].set(1.0).at[1, 1].set(1.0)
    s = jnp.dot(x, Ix, precision=hi)
    y = jnp.tanh(jnp.dot(x, params['w1'].T, precision=hi) + params['b1'])
    y = jnp.tanh(jnp.dot(y, params['w2'].T, precision=hi) + params['b2']); y = y + s; s = y
    y = jnp.tanh(jnp.dot(y, params['w3'].T, precision=hi) + params['b3'])
    y = jnp.tanh(jnp.dot(y, params['w4'].T, precision=hi) + params['b4']); y = y + s; s = y
    y = jnp.tanh(jnp.dot(y, params['w5'].T, precision=hi) + params['b5'])
    y = jnp.tanh(jnp.dot(y, params['w6'].T, precision=hi) + params['b6']); y = y + s
    y = jnp.dot(y, params['wout'].T, precision=hi)[:, 0]
    x1, x2 = x[:, 0], x[:, 1]
    pi = math.pi
    if boundary_control_type == 'none':
        return y
    if boundary_control_type == 'u_net':
        mask = x2 > 0.5 * x1 - 0.4
        const = math.exp(-5.0 * (1.0 + (-1.0 + 0.9) ** 2))
        base = jnp.where(mask, 0.0,
                         jnp.exp(-5.0 * (x1 ** 2 + (-1.0 - 0.9 * x1) ** 2))
                         + jnp.exp(-5.0 * (1.0 + (x2 + 0.9) ** 2)) - const)
        return jnp.cos(-pi / 4 + pi / 4 * x1) * jnp.cos(-pi / 4 + pi / 4 * x2) * y + base
    if boundary_control_type == 'v_net':
        return jnp.cos(pi / 4 + pi / 4 * x1) * jnp.cos(pi / 4 + pi / 4 * x2) * y
    return y


# --------------------------------------------------------------------------
if __name__ == "__main__":
    m, dim, N = 32, 2, 1024
    key = jax.random.PRNGKey(0)
    kx, kp = jax.random.split(key)

    x = jax.random.uniform(kx, (N, dim), jnp.float32, minval=-1.0, maxval=1.0)
    params = init_params(kp, m, dim)
    packed = pack_params(params)          # one-time weight repack (bf16 MXU weights etc.)
    xt = jnp.asarray(x.T)                 # cache the (dim, N) layout upstream, once

    # Tolerance is relaxed vs. the f32 HIGHEST reference because the (m, m)
    # MXU dots use bf16 inputs (f32 accumulation).
    TOL = 2e-2

    for bc in ('none', 'u_net', 'v_net'):
        y = tanh_resnet_forward_t(xt, packed, boundary_control_type=bc)
        jax.block_until_ready(y)
        assert y.shape == (N,)
        assert bool(jnp.all(jnp.isfinite(y)))
        y_ref = tanh_resnet_reference(x, params, boundary_control_type=bc)
        err = float(jnp.max(jnp.abs(y - y_ref)))
        scale = 1.0 + float(jnp.max(jnp.abs(y_ref)))
        assert err < TOL * scale, f"{bc}: max abs err {err}"

    # (N, dim) convenience entry + ragged batch (partial last tile, no jnp.pad).
    N2 = 1000
    x2 = jax.random.uniform(jax.random.PRNGKey(1), (N2, dim), jnp.float32, -1.0, 1.0)
    y2 = tanh_resnet_forward(x2, packed, boundary_control_type='none')
    jax.block_until_ready(y2)
    assert y2.shape == (N2,)
    y2_ref = tanh_resnet_reference(x2, params, 'none')
    err2 = float(jnp.max(jnp.abs(y2 - y2_ref)))
    assert err2 < TOL * (1.0 + float(jnp.max(jnp.abs(y2_ref)))), f"ragged: {err2}"

    print("KERNEL_OK")
</pallas_src>

<mosaic_0001>
module attributes {stable_mosaic.version = 11 : i64} {
  func.func @_tanh_resnet_kernel(%arg0: i32, %arg1: memref<2x1024xf32, #tpu.memory_space<vmem>>, %arg2: memref<2x32x1xf32, #tpu.memory_space<vmem>>, %arg3: memref<5x32x32xbf16, #tpu.memory_space<vmem>>, %arg4: memref<6x32x1xf32, #tpu.memory_space<vmem>>, %arg5: memref<32x1xf32, #tpu.memory_space<vmem>>, %arg6: memref<1x1024xf32, #tpu.memory_space<vmem>>) attributes {dimension_semantics = [#tpu.dimension_semantics<parallel>], iteration_bounds = array<i64: 1>, scalar_prefetch = 0 : i64, scratch_operands = 0 : i64, tpu.core_type = #tpu.core_type<tc>, window_params = [{transform_indices = @transform_0, window_bounds = array<i64: 2, 1024>}, {pipeline_mode = #tpu.pipeline_mode<synchronous>, transform_indices = @transform_1, window_bounds = array<i64: 2, 32, 1>}, {pipeline_mode = #tpu.pipeline_mode<synchronous>, transform_indices = @transform_2, window_bounds = array<i64: 5, 32, 32>}, {pipeline_mode = #tpu.pipeline_mode<synchronous>, transform_indices = @transform_3, window_bounds = array<i64: 6, 32, 1>}, {pipeline_mode = #tpu.pipeline_mode<synchronous>, transform_indices = @transform_4, window_bounds = array<i64: 32, 1>}, {transform_indices = @transform_5, window_bounds = array<i64: 1, 1024>}]} {
    %c0 = arith.constant 0 : index
    %c0_0 = arith.constant 0 : index
    %0 = vector.load %arg1[%c0, %c0_0] : memref<2x1024xf32, #tpu.memory_space<vmem>>, vector<2x1024xf32>
    %1 = vector.extract_strided_slice %0 {offsets = [0, 0], sizes = [1, 1024], strides = [1, 1]} : vector<2x1024xf32> to vector<1x1024xf32>
    %2 = vector.extract_strided_slice %0 {offsets = [1, 0], sizes = [1, 1024], strides = [1, 1]} : vector<2x1024xf32> to vector<1x1024xf32>
    %c0_1 = arith.constant 0 : index
    %c0_2 = arith.constant 0 : index
    %c0_3 = arith.constant 0 : index
    %3 = vector.load %arg4[%c0_1, %c0_2, %c0_3] : memref<6x32x1xf32, #tpu.memory_space<vmem>>, vector<1x32x1xf32>
    %4 = vector.shape_cast %3 : vector<1x32x1xf32> to vector<32x1xf32>
    %c1 = arith.constant 1 : index
    %c0_4 = arith.constant 0 : index
    %c0_5 = arith.constant 0 : index
    %5 = vector.load %arg4[%c1, %c0_4, %c0_5] : memref<6x32x1xf32, #tpu.memory_space<vmem>>, vector<1x32x1xf32>
    %6 = vector.shape_cast %5 : vector<1x32x1xf32> to vector<32x1xf32>
    %c2 = arith.constant 2 : index
    %c0_6 = arith.constant 0 : index
    %c0_7 = arith.constant 0 : index
    %7 = vector.load %arg4[%c2, %c0_6, %c0_7] : memref<6x32x1xf32, #tpu.memory_space<vmem>>, vector<1x32x1xf32>
    %8 = vector.shape_cast %7 : vector<1x32x1xf32> to vector<32x1xf32>
    %c3 = arith.constant 3 : index
    %c0_8 = arith.constant 0 : index
    %c0_9 = arith.constant 0 : index
    %9 = vector.load %arg4[%c3, %c0_8, %c0_9] : memref<6x32x1xf32, #tpu.memory_space<vmem>>, vector<1x32x1xf32>
    %10 = vector.shape_cast %9 : vector<1x32x1xf32> to vector<32x1xf32>
    %c4 = arith.constant 4 : index
    %c0_10 = arith.constant 0 : index
    %c0_11 = arith.constant 0 : index
    %11 = vector.load %arg4[%c4, %c0_10, %c0_11] : memref<6x32x1xf32, #tpu.memory_space<vmem>>, vector<1x32x1xf32>
    %12 = vector.shape_cast %11 : vector<1x32x1xf32> to vector<32x1xf32>
    %c5 = arith.constant 5 : index
    %c0_12 = arith.constant 0 : index
    %c0_13 = arith.constant 0 : index
    %13 = vector.load %arg4[%c5, %c0_12, %c0_13] : memref<6x32x1xf32, #tpu.memory_space<vmem>>, vector<1x32x1xf32>
    %14 = vector.shape_cast %13 : vector<1x32x1xf32> to vector<32x1xf32>
    %15 = tpu.iota {dimensions = array<i32: 0>} : vector<32x1xi32>
    %c0_i32 = arith.constant 0 : i32
    %16 = vector.broadcast %c0_i32 : i32 to vector<32x1xi32>
    %17 = arith.cmpi eq, %15, %16 : vector<32x1xi32>
    %18 = arith.extui %17 : vector<32x1xi1> to vector<32x1xi32>
    %19 = arith.sitofp %18 : vector<32x1xi32> to vector<32x1xf32>
    %c1_i32 = arith.constant 1 : i32
    %20 = vector.broadcast %c1_i32 : i32 to vector<32x1xi32>
    %21 = arith.cmpi eq, %15, %20 : vector<32x1xi32>
    %22 = arith.extui %21 : vector<32x1xi1> to vector<32x1xi32>
    %23 = arith.sitofp %22 : vector<32x1xi32> to vector<32x1xf32>
    %24 = vector.broadcast %19 : vector<32x1xf32> to vector<32x1024xf32>
    %25 = vector.broadcast %1 : vector<1x1024xf32> to vector<32x1024xf32>
    %26 = arith.mulf %24, %25 : vector<32x1024xf32>
    %27 = vector.broadcast %23 : vector<32x1xf32> to vector<32x1024xf32>
    %28 = vector.broadcast %2 : vector<1x1024xf32> to vector<32x1024xf32>
    %29 = arith.mulf %27, %28 : vector<32x1024xf32>
    %30 = arith.addf %26, %29 : vector<32x1024xf32>
    %c0_14 = arith.constant 0 : index
    %c0_15 = arith.constant 0 : index
    %c0_16 = arith.constant 0 : index
    %31 = vector.load %arg2[%c0_14, %c0_15, %c0_16] : memref<2x32x1xf32, #tpu.memory_space<vmem>>, vector<1x32x1xf32>
    %32 = vector.shape_cast %31 : vector<1x32x1xf32> to vector<32x1xf32>
    %33 = vector.broadcast %32 : vector<32x1xf32> to vector<32x1024xf32>
    %34 = vector.broadcast %1 : vector<1x1024xf32> to vector<32x1024xf32>
    %35 = arith.mulf %33, %34 : vector<32x1024xf32>
    %c1_17 = arith.constant 1 : index
    %c0_18 = arith.constant 0 : index
    %c0_19 = arith.constant 0 : index
    %36 = vector.load %arg2[%c1_17, %c0_18, %c0_19] : memref<2x32x1xf32, #tpu.memory_space<vmem>>, vector<1x32x1xf32>
    %37 = vector.shape_cast %36 : vector<1x32x1xf32> to vector<32x1xf32>
    %38 = vector.broadcast %37 : vector<32x1xf32> to vector<32x1024xf32>
    %39 = vector.broadcast %2 : vector<1x1024xf32> to vector<32x1024xf32>
    %40 = arith.mulf %38, %39 : vector<32x1024xf32>
    %41 = arith.addf %35, %40 : vector<32x1024xf32>
    %42 = vector.broadcast %4 : vector<32x1xf32> to vector<32x1024xf32>
    %43 = arith.addf %41, %42 : vector<32x1024xf32>
    %44 = math.tanh %43 : vector<32x1024xf32>
    %c0_20 = arith.constant 0 : index
    %c0_21 = arith.constant 0 : index
    %c0_22 = arith.constant 0 : index
    %45 = vector.load %arg3[%c0_20, %c0_21, %c0_22] : memref<5x32x32xbf16, #tpu.memory_space<vmem>>, vector<1x32x32xbf16>
    %46 = vector.shape_cast %45 : vector<1x32x32xbf16> to vector<32x32xbf16>
    %47 = arith.truncf %44 : vector<32x1024xf32> to vector<32x1024xbf16>
    %cst = arith.constant dense<0.000000e+00> : vector<32x1024xf32>
    %48 = tpu.matmul %46, %47, %cst {dimension_numbers = #tpu.dot_dimension_numbers<[1], [0], [0], [1], [0, 0, 1, 1], [], []>} : vector<32x32xbf16>, vector<32x1024xbf16>, vector<32x1024xf32> -> vector<32x1024xf32>
    %49 = vector.broadcast %6 : vector<32x1xf32> to vector<32x1024xf32>
    %50 = arith.addf %48, %49 : vector<32x1024xf32>
    %51 = math.tanh %50 : vector<32x1024xf32>
    %52 = arith.addf %51, %30 : vector<32x1024xf32>
    %c1_23 = arith.constant 1 : index
    %c0_24 = arith.constant 0 : index
    %c0_25 = arith.constant 0 : index
    %53 = vector.load %arg3[%c1_23, %c0_24, %c0_25] : memref<5x32x32xbf16, #tpu.memory_space<vmem>>, vector<1x32x32xbf16>
    %54 = vector.shape_cast %53 : vector<1x32x32xbf16> to vector<32x32xbf16>
    %55 = arith.truncf %52 : vector<32x1024xf32> to vector<32x1024xbf16>
    %cst_26 = arith.constant dense<0.000000e+00> : vector<32x1024xf32>
    %56 = tpu.matmul %54, %55, %cst_26 {dimension_numbers = #tpu.dot_dimension_numbers<[1], [0], [0], [1], [0, 0, 1, 1], [], []>} : vector<32x32xbf16>, vector<32x1024xbf16>, vector<32x1024xf32> -> vector<32x1024xf32>
    %57 = vector.broadcast %8 : vector<32x1xf32> to vector<32x1024xf32>
    %58 = arith.addf %56, %57 : vector<32x1024xf32>
    %59 = math.tanh %58 : vector<32x1024xf32>
    %c2_27 = arith.constant 2 : index
    %c0_28 = arith.constant 0 : index
    %c0_29 = arith.constant 0 : index
    %60 = vector.load %arg3[%c2_27, %c0_28, %c0_29] : memref<5x32x32xbf16, #tpu.memory_space<vmem>>, vector<1x32x32xbf16>
    %61 = vector.shape_cast %60 : vector<1x32x32xbf16> to vector<32x32xbf16>
    %62 = arith.truncf %59 : vector<32x1024xf32> to vector<32x1024xbf16>
    %cst_30 = arith.constant dense<0.000000e+00> : vector<32x1024xf32>
    %63 = tpu.matmul %61, %62, %cst_30 {dimension_numbers = #tpu.dot_dimension_numbers<[1], [0], [0], [1], [0, 0, 1, 1], [], []>} : vector<32x32xbf16>, vector<32x1024xbf16>, vector<32x1024xf32> -> vector<32x1024xf32>
    %64 = vector.broadcast %10 : vector<32x1xf32> to vector<32x1024xf32>
    %65 = arith.addf %63, %64 : vector<32x1024xf32>
    %66 = math.tanh %65 : vector<32x1024xf32>
    %67 = arith.addf %66, %52 : vector<32x1024xf32>
    %c3_31 = arith.constant 3 : index
    %c0_32 = arith.constant 0 : index
    %c0_33 = arith.constant 0 : index
    %68 = vector.load %arg3[%c3_31, %c0_32, %c0_33] : memref<5x32x32xbf16, #tpu.memory_space<vmem>>, vector<1x32x32xbf16>
    %69 = vector.shape_cast %68 : vector<1x32x32xbf16> to vector<32x32xbf16>
    %70 = arith.truncf %67 : vector<32x1024xf32> to vector<32x1024xbf16>
    %cst_34 = arith.constant dense<0.000000e+00> : vector<32x1024xf32>
    %71 = tpu.matmul %69, %70, %cst_34 {dimension_numbers = #tpu.dot_dimension_numbers<[1], [0], [0], [1], [0, 0, 1, 1], [], []>} : vector<32x32xbf16>, vector<32x1024xbf16>, vector<32x1024xf32> -> vector<32x1024xf32>
    %72 = vector.broadcast %12 : vector<32x1xf32> to vector<32x1024xf32>
    %73 = arith.addf %71, %72 : vector<32x1024xf32>
    %74 = math.tanh %73 : vector<32x1024xf32>
    %c4_35 = arith.constant 4 : index
    %c0_36 = arith.constant 0 : index
    %c0_37 = arith.constant 0 : index
    %75 = vector.load %arg3[%c4_35, %c0_36, %c0_37] : memref<5x32x32xbf16, #tpu.memory_space<vmem>>, vector<1x32x32xbf16>
    %76 = vector.shape_cast %75 : vector<1x32x32xbf16> to vector<32x32xbf16>
    %77 = arith.truncf %74 : vector<32x1024xf32> to vector<32x1024xbf16>
    %cst_38 = arith.constant dense<0.000000e+00> : vector<32x1024xf32>
    %78 = tpu.matmul %76, %77, %cst_38 {dimension_numbers = #tpu.dot_dimension_numbers<[1], [0], [0], [1], [0, 0, 1, 1], [], []>} : vector<32x32xbf16>, vector<32x1024xbf16>, vector<32x1024xf32> -> vector<32x1024xf32>
    %79 = vector.broadcast %14 : vector<32x1xf32> to vector<32x1024xf32>
    %80 = arith.addf %78, %79 : vector<32x1024xf32>
    %81 = math.tanh %80 : vector<32x1024xf32>
    %82 = arith.addf %81, %67 : vector<32x1024xf32>
    %c0_39 = arith.constant 0 : index
    %c0_40 = arith.constant 0 : index
    %83 = vector.load %arg5[%c0_39, %c0_40] : memref<32x1xf32, #tpu.memory_space<vmem>>, vector<32x1xf32>
    %84 = vector.broadcast %83 : vector<32x1xf32> to vector<32x1024xf32>
    %85 = arith.mulf %82, %84 : vector<32x1024xf32>
    %cst_41 = arith.constant dense<0.000000e+00> : vector<1024xf32>
    %86 = vector.multi_reduction <add>, %85, %cst_41 [0] : vector<32x1024xf32> to vector<1024xf32>
    %87 = vector.shape_cast %86 : vector<1024xf32> to vector<1x1024xf32>
    %c0_42 = arith.constant 0 : index
    %c0_43 = arith.constant 0 : index
    %88 = vector.load %arg6[%c0_42, %c0_43] : memref<1x1024xf32, #tpu.memory_space<vmem>>, vector<1x1024xf32>
    tpu.vector_store %arg6[%c0_42, %c0_43], %87 {strides = array<i32>} : memref<1x1024xf32, #tpu.memory_space<vmem>>, vector<1x1024xf32>,
    return
  }
  func.func @transform_0(%arg0: i32) -> (i32, i32) {
    %c0_i32 = arith.constant 0 : i32
    %c0_i32_0 = arith.constant 0 : i32
    return %c0_i32, %arg0 : i32, i32
  }
  func.func @transform_1(%arg0: i32) -> (i32, i32, i32) {
    %c0_i32 = arith.constant 0 : i32
    %c0_i32_0 = arith.constant 0 : i32
    %c0_i32_1 = arith.constant 0 : i32
    %c0_i32_2 = arith.constant 0 : i32
    return %c0_i32, %c0_i32_0, %c0_i32_1 : i32, i32, i32
  }
  func.func @transform_2(%arg0: i32) -> (i32, i32, i32) {
    %c0_i32 = arith.constant 0 : i32
    %c0_i32_0 = arith.constant 0 : i32
    %c0_i32_1 = arith.constant 0 : i32
    %c0_i32_2 = arith.constant 0 : i32
    return %c0_i32, %c0_i32_0, %c0_i32_1 : i32, i32, i32
  }
  func.func @transform_3(%arg0: i32) -> (i32, i32, i32) {
    %c0_i32 = arith.constant 0 : i32
    %c0_i32_0 = arith.constant 0 : i32
    %c0_i32_1 = arith.constant 0 : i32
    %c0_i32_2 = arith.constant 0 : i32
    return %c0_i32, %c0_i32_0, %c0_i32_1 : i32, i32, i32
  }
  func.func @transform_4(%arg0: i32) -> (i32, i32) {
    %c0_i32 = arith.constant 0 : i32
    %c0_i32_0 = arith.constant 0 : i32
    %c0_i32_1 = arith.constant 0 : i32
    return %c0_i32, %c0_i32_0 : i32, i32
  }
  func.func @transform_5(%arg0: i32) -> (i32, i32) {
    %c0_i32 = arith.constant 0 : i32
    %c0_i32_0 = arith.constant 0 : i32
    return %c0_i32, %arg0 : i32, i32
  }
}

</mosaic_0001>

<llo_original>
// kernel: _forward_jit.1
$region0: #{_forward_jit.1}
  #allocation0 [shape = 'u32[]', space=smem, size = 0x4, offset = 0x4, fixed_abs, tag = 'smem constant byte address 0x4 - core index']
  #allocation1 [shape = 'u32[144,128]{1,0:T(1,128)}', space=vmem, size = 0x12000, scoped, tag = 'internal scratch']
  %s0 = inlined_call_operand.vmem [shape: f32[2,1024], index: 0, kind: input, shape index: {}]
  %s1 = inlined_call_operand.vmem [shape: f32[2,32,1], index: 1, kind: input, shape index: {}]
  %s2 = inlined_call_operand.vmem [shape: bf16[5,32,32], index: 2, kind: input, shape index: {}]
  %s3 = inlined_call_operand.vmem [shape: f32[6,32,1], index: 3, kind: input, shape index: {}]
  %s4 = inlined_call_operand.vmem [shape: f32[32,1], index: 4, kind: input, shape index: {}]
  %s5 = inlined_call_operand.hbm [shape: f32[1,1024], index: 5, kind: output, shape index: {}]
  %s6 = sld [smem:[#allocation0]]
  $region30: #{_forward_jit.1} parent=0
    _
  %s8 = ssub.s32 1, %s6
  %s9 = scalar_select 0, %s8, %s6
  $region1: #{_forward_jit.1} parent=0
    #allocation2 [shape = 'u8[4096]{0}', space=vmem, size = 0x1000, scoped, tag = 'output window, operand 0, single buffered']
    #allocation3 [shape = 's32[1]{0}', space=sflag, size = 0x4, scoped, tag = 'scoped memory for _forward_jit.1']
    %10 = vsyncpa [#allocation3], 0
    // Predicated region
    $region2: #{_forward_jit.1} parent=1 // pred_check
      _
    $region3: #{_forward_jit.1} parent=1 // pred_check_branch
      %12 = sbr.rel (0) target = $region5
    $region4: #{_forward_jit.1} parent=1 // pred_region
      _
    $region5: #{_forward_jit.1} parent=1 // pred_fallthru
      _
    // Predicated region
    $region6: #{_forward_jit.1} parent=1 // pred_check
      _
    $region7: #{_forward_jit.1} parent=1 // pred_check_branch
      %14 = sbr.rel (0) target = $region9
    $region8: #{_forward_jit.1} parent=1 // pred_region
      _
    $region9: #{_forward_jit.1} parent=1 // pred_fallthru
      _
    // Predicated region
    $region10: #{_forward_jit.1} parent=1 // pred_check
      _
    $region11: #{_forward_jit.1} parent=1 // pred_check_branch
      %16 = sbr.rel (0) target = $region13
    $region12: #{_forward_jit.1} parent=1 // pred_region
      _
    $region13: #{_forward_jit.1} parent=1 // pred_fallthru
      _
    // Predicated region
    $region14: #{_forward_jit.1} parent=1 // pred_check
      _
    $region15: #{_forward_jit.1} parent=1 // pred_check_branch
      %18 = sbr.rel (0) target = $region17
    $region16: #{_forward_jit.1} parent=1 // pred_region
      _
    $region17: #{_forward_jit.1} parent=1 // pred_fallthru
      _
    // Predicated region
    $region18: #{_forward_jit.1} parent=1 // pred_check
      _
    $region19: #{_forward_jit.1} parent=1 // pred_check_branch
      %20 = sbr.rel (0) target = $region21
    $region20: #{_forward_jit.1} parent=1 // pred_region
      _
    $region21: #{_forward_jit.1} parent=1 // pred_fallthru
      _
    %v22 = vld [vmem:[%s0] sm:$0xff]
    %v23 = vld [vmem:[%s0 + $0x8] sm:$0xff]
    %v24 = vld [vmem:[%s3] sm:$0xff]
    %v25 = vld [vmem:[%s3 + $0x8] sm:$0xff]
    %v26 = vld [vmem:[%s3 + $0x10] sm:$0xff]
    %v27 = vld [vmem:[%s3 + $0x18] sm:$0xff]
    %s28 = scalar_lea.vmem %s3, 32
    %v29 = vld [vmem:[%s28] sm:$0xff]
    %v30 = vld [vmem:[%s28 + $0x8] sm:$0xff]
    %v31 = vld [vmem:[%s28 + $0x10] sm:$0xff]
    %v32 = vld [vmem:[%s28 + $0x18] sm:$0xff]
    %s33 = scalar_lea.vmem %s3, 64
    %v34 = vld [vmem:[%s33] sm:$0xff]
    %v35 = vld [vmem:[%s33 + $0x8] sm:$0xff]
    %v36 = vld [vmem:[%s33 + $0x10] sm:$0xff]
    %v37 = vld [vmem:[%s33 + $0x18] sm:$0xff]
    %s38 = scalar_lea.vmem %s3, 96
    %v39 = vld [vmem:[%s38] sm:$0xff]
    %v40 = vld [vmem:[%s38 + $0x8] sm:$0xff]
    %v41 = vld [vmem:[%s38 + $0x10] sm:$0xff]
    %v42 = vld [vmem:[%s38 + $0x18] sm:$0xff]
    %s43 = scalar_lea.vmem %s3, 128
    %v44 = vld [vmem:[%s43] sm:$0xff]
    %v45 = vld [vmem:[%s43 + $0x8] sm:$0xff]
    %v46 = vld [vmem:[%s43 + $0x10] sm:$0xff]
    %v47 = vld [vmem:[%s43 + $0x18] sm:$0xff]
    %s48 = scalar_lea.vmem %s3, 160
    %v49 = vld [vmem:[%s48] sm:$0xff]
    %v50 = vld [vmem:[%s48 + $0x8] sm:$0xff]
    %v51 = vld [vmem:[%s48 + $0x10] sm:$0xff]
    %v52 = vld [vmem:[%s48 + $0x18] sm:$0xff]
    %v53 = vlaneseq
    %v54 = vshrl.u32 %v53, 7
    %v55 = vadd.s32 %v54, 8
    %v56 = vadd.s32 %v54, 16
    %v57 = vadd.s32 %v54, 24
    %vm58 = vcmp.eq.s32.totalorder %v54, 0
    %vm59 = vcmp.eq.s32.totalorder %v55, 0
    %vm60 = vcmp.eq.s32.totalorder %v56, 0
    %vm61 = vcmp.eq.s32.totalorder %v57, 0
    %v62 = vsel %vm58, 1, 0
    %v63 = vsel %vm59, 1, 0
    %v64 = vsel %vm60, 1, 0
    %v65 = vsel %vm61, 1, 0
    %v66 = vcvt.s32.f32 %v62
    %v67 = vcvt.s32.f32 %v63
    %v68 = vcvt.s32.f32 %v64
    %v69 = vcvt.s32.f32 %v65
    %vm70 = vcmp.eq.s32.totalorder %v54, 1
    %vm71 = vcmp.eq.s32.totalorder %v55, 1
    %vm72 = vcmp.eq.s32.totalorder %v56, 1
    %vm73 = vcmp.eq.s32.totalorder %v57, 1
    %v74 = vsel %vm70, 1, 0
    %v75 = vsel %vm71, 1, 0
    %v76 = vsel %vm72, 1, 0
    %v77 = vsel %vm73, 1, 0
    %v78 = vcvt.s32.f32 %v74
    %v79 = vcvt.s32.f32 %v75
    %v80 = vcvt.s32.f32 %v76
    %v81 = vcvt.s32.f32 %v77
    %v84 = vlaneseq
    %v85 = vshrl.u32 %v84, 7
    %v86 = vsub.s32 0, %v85
    %v87 = vrot.slane %v22, %v86
    %v88 = vlaneseq
    %v89 = vshrl.u32 %v88, 7
    %v90 = vsub.s32 2, %v89
    %v91 = vrot.slane %v22, %v90
    %v92 = vlaneseq
    %v93 = vshrl.u32 %v92, 7
    %v94 = vsub.s32 4, %v93
    %v95 = vrot.slane %v22, %v94
    %v96 = vlaneseq
    %v97 = vshrl.u32 %v96, 7
    %v98 = vsub.s32 6, %v97
    %v99 = vrot.slane %v22, %v98
    %v100 = vlaneseq
    %v101 = vshrl.u32 %v100, 7
    %v102 = vsub.s32 0, %v101
    %v103 = vrot.slane %v23, %v102
    %v104 = vlaneseq
    %v105 = vshrl.u32 %v104, 7
    %v106 = vsub.s32 2, %v105
    %v107 = vrot.slane %v23, %v106
    %v108 = vlaneseq
    %v109 = vshrl.u32 %v108, 7
    %v110 = vsub.s32 4, %v109
    %v111 = vrot.slane %v23, %v110
    %v112 = vlaneseq
    %v113 = vshrl.u32 %v112, 7
    %v114 = vsub.s32 6, %v113
    %v115 = vrot.slane %v23, %v114
    %v124 = vlaneseq
    %v125 = vshrl.u32 %v124, 7
    %v126 = vsub.s32 0, %v125
    %v127 = vrot.slane %v87, %v126
    %v128 = vlaneseq
    %v129 = vshrl.u32 %v128, 7
    %v130 = vsub.s32 0, %v129
    %v131 = vrot.slane %v91, %v130
    %v132 = vlaneseq
    %v133 = vshrl.u32 %v132, 7
    %v134 = vsub.s32 0, %v133
    %v135 = vrot.slane %v95, %v134
    %v136 = vlaneseq
    %v137 = vshrl.u32 %v136, 7
    %v138 = vsub.s32 0, %v137
    %v139 = vrot.slane %v99, %v138
    %v140 = vlaneseq
    %v141 = vshrl.u32 %v140, 7
    %v142 = vsub.s32 0, %v141
    %v143 = vrot.slane %v103, %v142
    %v144 = vlaneseq
    %v145 = vshrl.u32 %v144, 7
    %v146 = vsub.s32 0, %v145
    %v147 = vrot.slane %v107, %v146
    %v148 = vlaneseq
    %v149 = vshrl.u32 %v148, 7
    %v150 = vsub.s32 0, %v149
    %v151 = vrot.slane %v111, %v150
    %v152 = vlaneseq
    %v153 = vshrl.u32 %v152, 7
    %v154 = vsub.s32 0, %v153
    %v155 = vrot.slane %v115, %v154
    %v156 = vmul.f32 %v66, %v127
    %v157 = vmul.f32 %v66, %v131
    %v158 = vmul.f32 %v66, %v135
    %v159 = vmul.f32 %v66, %v139
    %v160 = vmul.f32 %v66, %v143
    %v161 = vmul.f32 %v66, %v147
    %v162 = vmul.f32 %v66, %v151
    %v163 = vmul.f32 %v66, %v155
    %v164 = vmul.f32 %v67, %v127
    %v165 = vmul.f32 %v67, %v131
    %v166 = vmul.f32 %v67, %v135
    %v167 = vmul.f32 %v67, %v139
    %v168 = vmul.f32 %v67, %v143
    %v169 = vmul.f32 %v67, %v147
    %v170 = vmul.f32 %v67, %v151
    %v171 = vmul.f32 %v67, %v155
    %v172 = vmul.f32 %v68, %v127
    %v173 = vmul.f32 %v68, %v131
    %v174 = vmul.f32 %v68, %v135
    %v175 = vmul.f32 %v68, %v139
    %v176 = vmul.f32 %v68, %v143
    %v177 = vmul.f32 %v68, %v147
    %v178 = vmul.f32 %v68, %v151
    %v179 = vmul.f32 %v68, %v155
    %v180 = vmul.f32 %v69, %v127
    %v181 = vmul.f32 %v69, %v131
    %v182 = vmul.f32 %v69, %v135
    %v183 = vmul.f32 %v69, %v139
    %v184 = vmul.f32 %v69, %v143
    %v185 = vmul.f32 %v69, %v147
    %v186 = vmul.f32 %v69, %v151
    %v187 = vmul.f32 %v69, %v155
    %v188 = vlaneseq
    %v189 = vshrl.u32 %v188, 7
    %v190 = vsub.s32 1, %v189
    %v191 = vrot.slane %v22, %v190
    %v192 = vlaneseq
    %v193 = vshrl.u32 %v192, 7
    %v194 = vsub.s32 3, %v193
    %v195 = vrot.slane %v22, %v194
    %v196 = vlaneseq
    %v197 = vshrl.u32 %v196, 7
    %v198 = vsub.s32 5, %v197
    %v199 = vrot.slane %v22, %v198
    %v200 = vlaneseq
    %v201 = vshrl.u32 %v200, 7
    %v202 = vsub.s32 7, %v201
    %v203 = vrot.slane %v22, %v202
    %v204 = vlaneseq
    %v205 = vshrl.u32 %v204, 7
    %v206 = vsub.s32 1, %v205
    %v207 = vrot.slane %v23, %v206
    %v208 = vlaneseq
    %v209 = vshrl.u32 %v208, 7
    %v210 = vsub.s32 3, %v209
    %v211 = vrot.slane %v23, %v210
    %v212 = vlaneseq
    %v213 = vshrl.u32 %v212, 7
    %v214 = vsub.s32 5, %v213
    %v215 = vrot.slane %v23, %v214
    %v216 = vlaneseq
    %v217 = vshrl.u32 %v216, 7
    %v218 = vsub.s32 7, %v217
    %v219 = vrot.slane %v23, %v218
    %v228 = vlaneseq
    %v229 = vshrl.u32 %v228, 7
    %v230 = vsub.s32 1, %v229
    %v231 = vrot.slane %v191, %v230
    %v232 = vlaneseq
    %v233 = vshrl.u32 %v232, 7
    %v234 = vsub.s32 1, %v233
    %v235 = vrot.slane %v195, %v234
    %v236 = vlaneseq
    %v237 = vshrl.u32 %v236, 7
    %v238 = vsub.s32 1, %v237
    %v239 = vrot.slane %v199, %v238
    %v240 = vlaneseq
    %v241 = vshrl.u32 %v240, 7
    %v242 = vsub.s32 1, %v241
    %v243 = vrot.slane %v203, %v242
    %v244 = vlaneseq
    %v245 = vshrl.u32 %v244, 7
    %v246 = vsub.s32 1, %v245
    %v247 = vrot.slane %v207, %v246
    %v248 = vlaneseq
    %v249 = vshrl.u32 %v248, 7
    %v250 = vsub.s32 1, %v249
    %v251 = vrot.slane %v211, %v250
    %v252 = vlaneseq
    %v253 = vshrl.u32 %v252, 7
    %v254 = vsub.s32 1, %v253
    %v255 = vrot.slane %v215, %v254
    %v256 = vlaneseq
    %v257 = vshrl.u32 %v256, 7
    %v258 = vsub.s32 1, %v257
    %v259 = vrot.slane %v219, %v258
    %v260 = vmul.f32 %v78, %v231
    %v261 = vmul.f32 %v78, %v235
    %v262 = vmul.f32 %v78, %v239
    %v263 = vmul.f32 %v78, %v243
    %v264 = vmul.f32 %v78, %v247
    %v265 = vmul.f32 %v78, %v251
    %v266 = vmul.f32 %v78, %v255
    %v267 = vmul.f32 %v78, %v259
    %v268 = vmul.f32 %v79, %v231
    %v269 = vmul.f32 %v79, %v235
    %v270 = vmul.f32 %v79, %v239
    %v271 = vmul.f32 %v79, %v243
    %v272 = vmul.f32 %v79, %v247
    %v273 = vmul.f32 %v79, %v251
    %v274 = vmul.f32 %v79, %v255
    %v275 = vmul.f32 %v79, %v259
    %v276 = vmul.f32 %v80, %v231
    %v277 = vmul.f32 %v80, %v235
    %v278 = vmul.f32 %v80, %v239
    %v279 = vmul.f32 %v80, %v243
    %v280 = vmul.f32 %v80, %v247
    %v281 = vmul.f32 %v80, %v251
    %v282 = vmul.f32 %v80, %v255
    %v283 = vmul.f32 %v80, %v259
    %v284 = vmul.f32 %v81, %v231
    %v285 = vmul.f32 %v81, %v235
    %v286 = vmul.f32 %v81, %v239
    %v287 = vmul.f32 %v81, %v243
    %v288 = vmul.f32 %v81, %v247
    %v289 = vmul.f32 %v81, %v251
    %v290 = vmul.f32 %v81, %v255
    %v291 = vmul.f32 %v81, %v259
    %v292 = vadd.f32 %v156, %v260
    %v293 = vadd.f32 %v157, %v261
    %v294 = vadd.f32 %v158, %v262
    %v295 = vadd.f32 %v159, %v263
    %v296 = vadd.f32 %v160, %v264
    %v297 = vadd.f32 %v161, %v265
    %v298 = vadd.f32 %v162, %v266
    %v299 = vadd.f32 %v163, %v267
    %v300 = vadd.f32 %v164, %v268
    %v301 = vadd.f32 %v165, %v269
    %v302 = vadd.f32 %v166, %v270
    %v303 = vadd.f32 %v167, %v271
    %v304 = vadd.f32 %v168, %v272
    %v305 = vadd.f32 %v169, %v273
    %v306 = vadd.f32 %v170, %v274
    %v307 = vadd.f32 %v171, %v275
    %v308 = vadd.f32 %v172, %v276
    %v309 = vadd.f32 %v173, %v277
    %v310 = vadd.f32 %v174, %v278
    %v311 = vadd.f32 %v175, %v279
    %v312 = vadd.f32 %v176, %v280
    %v313 = vadd.f32 %v177, %v281
    %v314 = vadd.f32 %v178, %v282
    %v315 = vadd.f32 %v179, %v283
    %v316 = vadd.f32 %v180, %v284
    %v317 = vadd.f32 %v181, %v285
    %v318 = vadd.f32 %v182, %v286
    %v319 = vadd.f32 %v183, %v287
    %v320 = vadd.f32 %v184, %v288
    %v321 = vadd.f32 %v185, %v289
    %v322 = vadd.f32 %v186, %v290
    %v323 = vadd.f32 %v187, %v291
    %v324 = vld [vmem:[%s1] sm:$0xff]
    %v325 = vld [vmem:[%s1 + $0x8] sm:$0xff]
    %v326 = vld [vmem:[%s1 + $0x10] sm:$0xff]
    %v327 = vld [vmem:[%s1 + $0x18] sm:$0xff]
    %329 = vset.pattern.permute.xlu0 0
    %330 = vperm.xlu0 %329, %v324
    %v331 = vpop.permute.xlu0 %330
    %334 = vset.pattern.permute.xlu0 0
    %335 = vperm.xlu0 %334, %v325
    %v336 = vpop.permute.xlu0 %335
    %339 = vset.pattern.permute.xlu0 0
    %340 = vperm.xlu0 %339, %v326
    %v341 = vpop.permute.xlu0 %340
    %344 = vset.pattern.permute.xlu0 0
    %345 = vperm.xlu0 %344, %v327
    %v346 = vpop.permute.xlu0 %345
    %v348 = vmul.f32 %v331, %v127
    %v349 = vmul.f32 %v331, %v131
    %v350 = vmul.f32 %v331, %v135
    %v351 = vmul.f32 %v331, %v139
    %v352 = vmul.f32 %v331, %v143
    %v353 = vmul.f32 %v331, %v147
    %v354 = vmul.f32 %v331, %v151
    %v355 = vmul.f32 %v331, %v155
    %v356 = vmul.f32 %v336, %v127
    %v357 = vmul.f32 %v336, %v131
    %v358 = vmul.f32 %v336, %v135
    %v359 = vmul.f32 %v336, %v139
    %v360 = vmul.f32 %v336, %v143
    %v361 = vmul.f32 %v336, %v147
    %v362 = vmul.f32 %v336, %v151
    %v363 = vmul.f32 %v336, %v155
    %v364 = vmul.f32 %v341, %v127
    %v365 = vmul.f32 %v341, %v131
    %v366 = vmul.f32 %v341, %v135
    %v367 = vmul.f32 %v341, %v139
    %v368 = vmul.f32 %v341, %v143
    %v369 = vmul.f32 %v341, %v147
    %v370 = vmul.f32 %v341, %v151
    %v371 = vmul.f32 %v341, %v155
    %v372 = vmul.f32 %v346, %v127
    %v373 = vmul.f32 %v346, %v131
    %v374 = vmul.f32 %v346, %v135
    %v375 = vmul.f32 %v346, %v139
    %v376 = vmul.f32 %v346, %v143
    %v377 = vmul.f32 %v346, %v147
    %v378 = vmul.f32 %v346, %v151
    %v379 = vmul.f32 %v346, %v155
    %s380 = scalar_lea.vmem %s1, 32
    %v381 = vld [vmem:[%s380] sm:$0xff]
    %v382 = vld [vmem:[%s380 + $0x8] sm:$0xff]
    %v383 = vld [vmem:[%s380 + $0x10] sm:$0xff]
    %v384 = vld [vmem:[%s380 + $0x18] sm:$0xff]
    %386 = vset.pattern.permute.xlu0 0
    %387 = vperm.xlu0 %386, %v381
    %v388 = vpop.permute.xlu0 %387
    %391 = vset.pattern.permute.xlu0 0
    %392 = vperm.xlu0 %391, %v382
    %v393 = vpop.permute.xlu0 %392
    %396 = vset.pattern.permute.xlu0 0
    %397 = vperm.xlu0 %396, %v383
    %v398 = vpop.permute.xlu0 %397
    %401 = vset.pattern.permute.xlu0 0
    %402 = vperm.xlu0 %401, %v384
    %v403 = vpop.permute.xlu0 %402
    %v405 = vmul.f32 %v388, %v231
    %v406 = vmul.f32 %v388, %v235
    %v407 = vmul.f32 %v388, %v239
    %v408 = vmul.f32 %v388, %v243
    %v409 = vmul.f32 %v388, %v247
    %v410 = vmul.f32 %v388, %v251
    %v411 = vmul.f32 %v388, %v255
    %v412 = vmul.f32 %v388, %v259
    %v413 = vmul.f32 %v393, %v231
    %v414 = vmul.f32 %v393, %v235
    %v415 = vmul.f32 %v393, %v239
    %v416 = vmul.f32 %v393, %v243
    %v417 = vmul.f32 %v393, %v247
    %v418 = vmul.f32 %v393, %v251
    %v419 = vmul.f32 %v393, %v255
    %v420 = vmul.f32 %v393, %v259
    %v421 = vmul.f32 %v398, %v231
    %v422 = vmul.f32 %v398, %v235
    %v423 = vmul.f32 %v398, %v239
    %v424 = vmul.f32 %v398, %v243
    %v425 = vmul.f32 %v398, %v247
    %v426 = vmul.f32 %v398, %v251
    %v427 = vmul.f32 %v398, %v255
    %v428 = vmul.f32 %v398, %v259
    %v429 = vmul.f32 %v403, %v231
    %v430 = vmul.f32 %v403, %v235
    %v431 = vmul.f32 %v403, %v239
    %v432 = vmul.f32 %v403, %v243
    %v433 = vmul.f32 %v403, %v247
    %v434 = vmul.f32 %v403, %v251
    %v435 = vmul.f32 %v403, %v255
    %v436 = vmul.f32 %v403, %v259
    %v437 = vadd.f32 %v348, %v405
    %v438 = vadd.f32 %v349, %v406
    %v439 = vadd.f32 %v350, %v407
    %v440 = vadd.f32 %v351, %v408
    %v441 = vadd.f32 %v352, %v409
    %v442 = vadd.f32 %v353, %v410
    %v443 = vadd.f32 %v354, %v411
    %v444 = vadd.f32 %v355, %v412
    %v445 = vadd.f32 %v356, %v413
    %v446 = vadd.f32 %v357, %v414
    %v447 = vadd.f32 %v358, %v415
    %v448 = vadd.f32 %v359, %v416
    %v449 = vadd.f32 %v360, %v417
    %v450 = vadd.f32 %v361, %v418
    %v451 = vadd.f32 %v362, %v419
    %v452 = vadd.f32 %v363, %v420
    %v453 = vadd.f32 %v364, %v421
    %v454 = vadd.f32 %v365, %v422
    %v455 = vadd.f32 %v366, %v423
    %v456 = vadd.f32 %v367, %v424
    %v457 = vadd.f32 %v368, %v425
    %v458 = vadd.f32 %v369, %v426
    %v459 = vadd.f32 %v370, %v427
    %v460 = vadd.f32 %v371, %v428
    %v461 = vadd.f32 %v372, %v429
    %v462 = vadd.f32 %v373, %v430
    %v463 = vadd.f32 %v374, %v431
    %v464 = vadd.f32 %v375, %v432
    %v465 = vadd.f32 %v376, %v433
    %v466 = vadd.f32 %v377, %v434
    %v467 = vadd.f32 %v378, %v435
    %v468 = vadd.f32 %v379, %v436
    %470 = vset.pattern.permute.xlu0 0
    %471 = vperm.xlu0 %470, %v24
    %v472 = vpop.permute.xlu0 %471
    %475 = vset.pattern.permute.xlu0 0
    %476 = vperm.xlu0 %475, %v25
    %v477 = vpop.permute.xlu0 %476
    %480 = vset.pattern.permute.xlu0 0
    %481 = vperm.xlu0 %480, %v26
    %v482 = vpop.permute.xlu0 %481
    %485 = vset.pattern.permute.xlu0 0
    %486 = vperm.xlu0 %485, %v27
    %v487 = vpop.permute.xlu0 %486
    %v489 = vadd.f32 %v437, %v472
    %v490 = vadd.f32 %v438, %v472
    %v491 = vadd.f32 %v439, %v472
    %v492 = vadd.f32 %v440, %v472
    %v493 = vadd.f32 %v441, %v472
    %v494 = vadd.f32 %v442, %v472
    %v495 = vadd.f32 %v443, %v472
    %v496 = vadd.f32 %v444, %v472
    %v497 = vadd.f32 %v445, %v477
    %v498 = vadd.f32 %v446, %v477
    %v499 = vadd.f32 %v447, %v477
    %v500 = vadd.f32 %v448, %v477
    %v501 = vadd.f32 %v449, %v477
    %v502 = vadd.f32 %v450, %v477
    %v503 = vadd.f32 %v451, %v477
    %v504 = vadd.f32 %v452, %v477
    %v505 = vadd.f32 %v453, %v482
    %v506 = vadd.f32 %v454, %v482
    %v507 = vadd.f32 %v455, %v482
    %v508 = vadd.f32 %v456, %v482
    %v509 = vadd.f32 %v457, %v482
    %v510 = vadd.f32 %v458, %v482
    %v511 = vadd.f32 %v459, %v482
    %v512 = vadd.f32 %v460, %v482
    %v513 = vadd.f32 %v461, %v487
    %v514 = vadd.f32 %v462, %v487
    %v515 = vadd.f32 %v463, %v487
    %v516 = vadd.f32 %v464, %v487
    %v517 = vadd.f32 %v465, %v487
    %v518 = vadd.f32 %v466, %v487
    %v519 = vadd.f32 %v467, %v487
    %v520 = vadd.f32 %v468, %v487
    %v521 = vtanh.pop %v489
    %v522 = vtanh.pop %v490
    %v523 = vtanh.pop %v491
    %v524 = vtanh.pop %v492
    %v525 = vtanh.pop %v493
    %v526 = vtanh.pop %v494
    %v527 = vtanh.pop %v495
    %v528 = vtanh.pop %v496
    %v529 = vtanh.pop %v497
    %v530 = vtanh.pop %v498
    %v531 = vtanh.pop %v499
    %v532 = vtanh.pop %v500
    %v533 = vtanh.pop %v501
    %v534 = vtanh.pop %v502
    %v535 = vtanh.pop %v503
    %v536 = vtanh.pop %v504
    %v537 = vtanh.pop %v505
    %v538 = vtanh.pop %v506
    %v539 = vtanh.pop %v507
    %v540 = vtanh.pop %v508
    %v541 = vtanh.pop %v509
    %v542 = vtanh.pop %v510
    %v543 = vtanh.pop %v511
    %v544 = vtanh.pop %v512
    %v545 = vtanh.pop %v513
    %v546 = vtanh.pop %v514
    %v547 = vtanh.pop %v515
    %v548 = vtanh.pop %v516
    %v549 = vtanh.pop %v517
    %v550 = vtanh.pop %v518
    %v551 = vtanh.pop %v519
    %v552 = vtanh.pop %v520
    %v553 = vld [vmem:[%s2] sm:$0xf]
    %v554 = vld [vmem:[%s2 + $0x4] sm:$0xf]
    %v555 = vld [vmem:[%s2 + $0x8] sm:$0xf]
    %v556 = vld [vmem:[%s2 + $0xc] sm:$0xf]
    %v557 = vpack.c.bf16 %v529, %v521
    %v558 = vpack.c.bf16 %v530, %v522
    %v559 = vpack.c.bf16 %v531, %v523
    %v560 = vpack.c.bf16 %v532, %v524
    %v561 = vpack.c.bf16 %v533, %v525
    %v562 = vpack.c.bf16 %v534, %v526
    %v563 = vpack.c.bf16 %v535, %v527
    %v564 = vpack.c.bf16 %v536, %v528
    %v565 = vpack.c.bf16 %v545, %v537
    %v566 = vpack.c.bf16 %v546, %v538
    %v567 = vpack.c.bf16 %v547, %v539
    %v568 = vpack.c.bf16 %v548, %v540
    %v569 = vpack.c.bf16 %v549, %v541
    %v570 = vpack.c.bf16 %v550, %v542
    %v571 = vpack.c.bf16 %v551, %v543
    %v572 = vpack.c.bf16 %v552, %v544
    %574 = vset.pattern.permute.xlu0 0
    %575 = vperm.xlu0 %574, %v29
    %v576 = vpop.permute.xlu0 %575
    %579 = vset.pattern.permute.xlu0 0
    %580 = vperm.xlu0 %579, %v30
    %v581 = vpop.permute.xlu0 %580
    %584 = vset.pattern.permute.xlu0 0
    %585 = vperm.xlu0 %584, %v31
    %v586 = vpop.permute.xlu0 %585
    %589 = vset.pattern.permute.xlu0 0
    %590 = vperm.xlu0 %589, %v32
    %v591 = vpop.permute.xlu0 %590
    %v597 = vunpack.c.l.b16 %v553
    %v598 = vunpack.c.l.b16 %v554
    %v599 = vunpack.c.l.b16 %v555
    %v600 = vunpack.c.l.b16 %v556
    %v601 = vpack.c.b16 %v598, %v597
    %v602 = vpack.c.b16 %v600, %v599
    %vm603 = vcmask 261120
    %v605 = vsel %vm603, %v601, 0
    %v608 = vsel %vm603, %v602, 0
    %610 = vmatprep.subr.bf16.mxu0 %v558
    %611 = vmatpush1.bf16.msra.mxu0 %v557
    %612 = vmatprep.subr.bf16.mxu0 %v566
    %613 = vmatpush1.bf16.msra.mxu0 %v565
    %614 = vmatprep.subr.bf16.mxu0 0
    %615 = vmatpush1.bf16.msra.mxu0 0
    %616 = vmatprep.subr.bf16.mxu0 0
    %617 = vmatpush1.bf16.msra.mxu0 0
    %618 = vmatprep.subr.bf16.mxu0 0
    %619 = vmatpush1.bf16.msra.mxu0 0
    %620 = vmatprep.subr.bf16.mxu0 0
    %621 = vmatpush1.bf16.msra.mxu0 0
    %622 = vmatprep.subr.bf16.mxu0 0
    %623 = vmatpush1.bf16.msra.mxu0 0
    %624 = vmatprep.subr.bf16.mxu0 0
    %625 = vmatpush1.bf16.msra.mxu0 0
    %626 = vmatprep.subr.bf16.mxu0 0
    %627 = vmatpush1.bf16.msra.mxu0 0
    %628 = vmatprep.subr.bf16.mxu0 0
    %629 = vmatpush1.bf16.msra.mxu0 0
    %630 = vmatprep.subr.bf16.mxu0 0
    %631 = vmatpush1.bf16.msra.mxu0 0
    %632 = vmatprep.subr.bf16.mxu0 0
    %633 = vmatpush1.bf16.msra.mxu0 0
    %634 = vmatprep.subr.bf16.mxu0 0
    %635 = vmatpush1.bf16.msra.mxu0 0
    %636 = vmatprep.subr.bf16.mxu0 0
    %637 = vmatpush1.bf16.msra.mxu0 0
    %638 = vmatprep.subr.bf16.mxu0 0
    %639 = vmatpush1.bf16.msra.mxu0 0
    %640 = vmatprep.subr.bf16.mxu0 0
    %641 = vmatpush1.bf16.msra.mxu0 0
    %642 = vmatprep.mubr.bf16.mxu0 0
    %643 = vmatmul.mubr.bf16.gmra.mrb[0].mxu0 %v605
    %v644 = vpop.f32.mrb[0].mxu0
    %v645 = vadd.f32 %v576, %v644
    %v646 = vpop.f32.mrb[0].mxu0
    %v647 = vadd.f32 %v576, %v646
    %v648 = vpop.f32.mrb[0].mxu0
    %v649 = vadd.f32 %v581, %v648
    %v650 = vpop.f32.mrb[0].mxu0
    %v651 = vadd.f32 %v581, %v650
    %652 = vmatprep.mubr.bf16.mxu0 0
    %653 = vmatmul.mubr.bf16.gmra.mrb[0].mxu0 %v608
    %v654 = vpop.f32.mrb[0].mxu0
    %v655 = vadd.f32 %v586, %v654
    %v656 = vpop.f32.mrb[0].mxu0
    %v657 = vadd.f32 %v586, %v656
    %v658 = vpop.f32.mrb[0].mxu0
    %v659 = vadd.f32 %v591, %v658
    %v660 = vpop.f32.mrb[0].mxu0
    %v661 = vadd.f32 %v591, %v660
    %662 = vdwg.mxu0
    %663 = vmatprep.subr.bf16.mxu0 %v560
    %664 = vmatpush1.bf16.msra.mxu0 %v559
    %665 = vmatprep.subr.bf16.mxu0 %v568
    %666 = vmatpush1.bf16.msra.mxu0 %v567
    %667 = vmatprep.subr.bf16.mxu0 0
    %668 = vmatpush1.bf16.msra.mxu0 0
    %669 = vmatprep.subr.bf16.mxu0 0
    %670 = vmatpush1.bf16.msra.mxu0 0
    %671 = vmatprep.subr.bf16.mxu0 0
    %672 = vmatpush1.bf16.msra.mxu0 0
    %673 = vmatprep.subr.bf16.mxu0 0
    %674 = vmatpush1.bf16.msra.mxu0 0
    %675 = vmatprep.subr.bf16.mxu0 0
    %676 = vmatpush1.bf16.msra.mxu0 0
    %677 = vmatprep.subr.bf16.mxu0 0
    %678 = vmatpush1.bf16.msra.mxu0 0
    %679 = vmatprep.subr.bf16.mxu0 0
    %680 = vmatpush1.bf16.msra.mxu0 0
    %681 = vmatprep.subr.bf16.mxu0 0
    %682 = vmatpush1.bf16.msra.mxu0 0
    %683 = vmatprep.subr.bf16.mxu0 0
    %684 = vmatpush1.bf16.msra.mxu0 0
    %685 = vmatprep.subr.bf16.mxu0 0
    %686 = vmatpush1.bf16.msra.mxu0 0
    %687 = vmatprep.subr.bf16.mxu0 0
    %688 = vmatpush1.bf16.msra.mxu0 0
    %689 = vmatprep.subr.bf16.mxu0 0
    %690 = vmatpush1.bf16.msra.mxu0 0
    %691 = vmatprep.subr.bf16.mxu0 0
    %692 = vmatpush1.bf16.msra.mxu0 0
    %693 = vmatprep.subr.bf16.mxu0 0
    %694 = vmatpush1.bf16.msra.mxu0 0
    %695 = vmatprep.mubr.bf16.mxu0 0
    %696 = vmatmul.mubr.bf16.gmra.mrb[0].mxu0 %v605
    %v697 = vpop.f32.mrb[0].mxu0
    %v698 = vadd.f32 %v576, %v697
    %v699 = vpop.f32.mrb[0].mxu0
    %v700 = vadd.f32 %v576, %v699
    %v701 = vpop.f32.mrb[0].mxu0
    %v702 = vadd.f32 %v581, %v701
    %v703 = vpop.f32.mrb[0].mxu0
    %v704 = vadd.f32 %v581, %v703
    %705 = vmatprep.mubr.bf16.mxu0 0
    %706 = vmatmul.mubr.bf16.gmra.mrb[0].mxu0 %v608
    %v707 = vpop.f32.mrb[0].mxu0
    %v708 = vadd.f32 %v586, %v707
    %v709 = vpop.f32.mrb[0].mxu0
    %v710 = vadd.f32 %v586, %v709
    %v711 = vpop.f32.mrb[0].mxu0
    %v712 = vadd.f32 %v591, %v711
    %v713 = vpop.f32.mrb[0].mxu0
    %v714 = vadd.f32 %v591, %v713
    %715 = vdwg.mxu0
    %716 = vmatprep.subr.bf16.mxu0 %v562
    %717 = vmatpush1.bf16.msra.mxu0 %v561
    %718 = vmatprep.subr.bf16.mxu0 %v570
    %719 = vmatpush1.bf16.msra.mxu0 %v569
    %720 = vmatprep.subr.bf16.mxu0 0
    %721 = vmatpush1.bf16.msra.mxu0 0
    %722 = vmatprep.subr.bf16.mxu0 0
    %723 = vmatpush1.bf16.msra.mxu0 0
    %724 = vmatprep.subr.bf16.mxu0 0
    %725 = vmatpush1.bf16.msra.mxu0 0
    %726 = vmatprep.subr.bf16.mxu0 0
    %727 = vmatpush1.bf16.msra.mxu0 0
    %728 = vmatprep.subr.bf16.mxu0 0
    %729 = vmatpush1.bf16.msra.mxu0 0
    %730 = vmatprep.subr.bf16.mxu0 0
    %731 = vmatpush1.bf16.msra.mxu0 0
    %732 = vmatprep.subr.bf16.mxu0 0
    %733 = vmatpush1.bf16.msra.mxu0 0
    %734 = vmatprep.subr.bf16.mxu0 0
    %735 = vmatpush1.bf16.msra.mxu0 0
    %736 = vmatprep.subr.bf16.mxu0 0
    %737 = vmatpush1.bf16.msra.mxu0 0
    %738 = vmatprep.subr.bf16.mxu0 0
    %739 = vmatpush1.bf16.msra.mxu0 0
    %740 = vmatprep.subr.bf16.mxu0 0
    %741 = vmatpush1.bf16.msra.mxu0 0
    %742 = vmatprep.subr.bf16.mxu0 0
    %743 = vmatpush1.bf16.msra.mxu0 0
    %744 = vmatprep.subr.bf16.mxu0 0
    %745 = vmatpush1.bf16.msra.mxu0 0
    %746 = vmatprep.subr.bf16.mxu0 0
    %747 = vmatpush1.bf16.msra.mxu0 0
    %748 = vmatprep.mubr.bf16.mxu0 0
    %749 = vmatmul.mubr.bf16.gmra.mrb[0].mxu0 %v605
    %v750 = vpop.f32.mrb[0].mxu0
    %v751 = vadd.f32 %v576, %v750
    %v752 = vpop.f32.mrb[0].mxu0
    %v753 = vadd.f32 %v576, %v752
    %v754 = vpop.f32.mrb[0].mxu0
    %v755 = vadd.f32 %v581, %v754
    %v756 = vpop.f32.mrb[0].mxu0
    %v757 = vadd.f32 %v581, %v756
    %758 = vmatprep.mubr.bf16.mxu0 0
    %759 = vmatmul.mubr.bf16.gmra.mrb[0].mxu0 %v608
    %v760 = vpop.f32.mrb[0].mxu0
    %v761 = vadd.f32 %v586, %v760
    %v762 = vpop.f32.mrb[0].mxu0
    %v763 = vadd.f32 %v586, %v762
    %v764 = vpop.f32.mrb[0].mxu0
    %v765 = vadd.f32 %v591, %v764
    %v766 = vpop.f32.mrb[0].mxu0
    %v767 = vadd.f32 %v591, %v766
    %768 = vdwg.mxu0
    %769 = vmatprep.subr.bf16.mxu0 %v564
    %770 = vmatpush1.bf16.msra.mxu0 %v563
    %771 = vmatprep.subr.bf16.mxu0 %v572
    %772 = vmatpush1.bf16.msra.mxu0 %v571
    %773 = vmatprep.subr.bf16.mxu0 0
    %774 = vmatpush1.bf16.msra.mxu0 0
    %775 = vmatprep.subr.bf16.mxu0 0
    %776 = vmatpush1.bf16.msra.mxu0 0
    %777 = vmatprep.subr.bf16.mxu0 0
    %778 = vmatpush1.bf16.msra.mxu0 0
    %779 = vmatprep.subr.bf16.mxu0 0
    %780 = vmatpush1.bf16.msra.mxu0 0
    %781 = vmatprep.subr.bf16.mxu0 0
    %782 = vmatpush1.bf16.msra.mxu0 0
    %783 = vmatprep.subr.bf16.mxu0 0
    %784 = vmatpush1.bf16.msra.mxu0 0
    %785 = vmatprep.subr.bf16.mxu0 0
    %786 = vmatpush1.bf16.msra.mxu0 0
    %787 = vmatprep.subr.bf16.mxu0 0
    %788 = vmatpush1.bf16.msra.mxu0 0
    %789 = vmatprep.subr.bf16.mxu0 0
    %790 = vmatpush1.bf16.msra.mxu0 0
    %791 = vmatprep.subr.bf16.mxu0 0
    %792 = vmatpush1.bf16.msra.mxu0 0
    %793 = vmatprep.subr.bf16.mxu0 0
    %794 = vmatpush1.bf16.msra.mxu0 0
    %795 = vmatprep.subr.bf16.mxu0 0
    %796 = vmatpush1.bf16.msra.mxu0 0
    %797 = vmatprep.subr.bf16.mxu0 0
    %798 = vmatpush1.bf16.msra.mxu0 0
    %799 = vmatprep.subr.bf16.mxu0 0
    %800 = vmatpush1.bf16.msra.mxu0 0
    %801 = vmatprep.mubr.bf16.mxu0 0
    %802 = vmatmul.mubr.bf16.gmra.mrb[0].mxu0 %v605
    %v803 = vpop.f32.mrb[0].mxu0
    %v804 = vadd.f32 %v576, %v803
    %v805 = vpop.f32.mrb[0].mxu0
    %v806 = vadd.f32 %v576, %v805
    %v807 = vpop.f32.mrb[0].mxu0
    %v808 = vadd.f32 %v581, %v807
    %v809 = vpop.f32.mrb[0].mxu0
    %v810 = vadd.f32 %v581, %v809
    %811 = vmatprep.mubr.bf16.mxu0 0
    %812 = vmatmul.mubr.bf16.gmra.mrb[0].mxu0 %v608
    %v813 = vpop.f32.mrb[0].mxu0
    %v814 = vadd.f32 %v586, %v813
    %v815 = vpop.f32.mrb[0].mxu0
    %v816 = vadd.f32 %v586, %v815
    %v817 = vpop.f32.mrb[0].mxu0
    %v818 = vadd.f32 %v591, %v817
    %v819 = vpop.f32.mrb[0].mxu0
    %v820 = vadd.f32 %v591, %v819
    %821 = vdwg.mxu0
    %v822 = vtanh.pop %v645
    %v823 = vtanh.pop %v647
    %v824 = vtanh.pop %v698
    %v825 = vtanh.pop %v700
    %v826 = vtanh.pop %v751
    %v827 = vtanh.pop %v753
    %v828 = vtanh.pop %v804
    %v829 = vtanh.pop %v806
    %v830 = vtanh.pop %v649
    %v831 = vtanh.pop %v651
    %v832 = vtanh.pop %v702
    %v833 = vtanh.pop %v704
    %v834 = vtanh.pop %v755
    %v835 = vtanh.pop %v757
    %v836 = vtanh.pop %v808
    %v837 = vtanh.pop %v810
    %v838 = vtanh.pop %v655
    %v839 = vtanh.pop %v657
    %v840 = vtanh.pop %v708
    %v841 = vtanh.pop %v710
    %v842 = vtanh.pop %v761
    %v843 = vtanh.pop %v763
    %v844 = vtanh.pop %v814
    %v845 = vtanh.pop %v816
    %v846 = vtanh.pop %v659
    %v847 = vtanh.pop %v661
    %v848 = vtanh.pop %v712
    %v849 = vtanh.pop %v714
    %v850 = vtanh.pop %v765
    %v851 = vtanh.pop %v767
    %v852 = vtanh.pop %v818
    %v853 = vtanh.pop %v820
    %v854 = vadd.f32 %v822, %v292
    %v855 = vadd.f32 %v823, %v293
    %v856 = vadd.f32 %v824, %v294
    %v857 = vadd.f32 %v825, %v295
    %v858 = vadd.f32 %v826, %v296
    %v859 = vadd.f32 %v827, %v297
    %v860 = vadd.f32 %v828, %v298
    %v861 = vadd.f32 %v829, %v299
    %v862 = vadd.f32 %v830, %v300
    %v863 = vadd.f32 %v831, %v301
    %v864 = vadd.f32 %v832, %v302
    %v865 = vadd.f32 %v833, %v303
    %v866 = vadd.f32 %v834, %v304
    %v867 = vadd.f32 %v835, %v305
    %v868 = vadd.f32 %v836, %v306
    %v869 = vadd.f32 %v837, %v307
    %v870 = vadd.f32 %v838, %v308
    %v871 = vadd.f32 %v839, %v309
    %v872 = vadd.f32 %v840, %v310
    %v873 = vadd.f32 %v841, %v311
    %v874 = vadd.f32 %v842, %v312
    %v875 = vadd.f32 %v843, %v313
    %v876 = vadd.f32 %v844, %v314
    %v877 = vadd.f32 %v845, %v315
    %v878 = vadd.f32 %v846, %v316
    %v879 = vadd.f32 %v847, %v317
    %v880 = vadd.f32 %v848, %v318
    %v881 = vadd.f32 %v849, %v319
    %v882 = vadd.f32 %v850, %v320
    %v883 = vadd.f32 %v851, %v321
    %v884 = vadd.f32 %v852, %v322
    %v885 = vadd.f32 %v853, %v323
    %s886 = scalar_lea.vmem %s2, 16
    %v887 = vld [vmem:[%s886] sm:$0xf]
    %v888 = vld [vmem:[%s886 + $0x4] sm:$0xf]
    %v889 = vld [vmem:[%s886 + $0x8] sm:$0xf]
    %v890 = vld [vmem:[%s886 + $0xc] sm:$0xf]
    %v891 = vpack.c.bf16 %v862, %v854
    %v892 = vpack.c.bf16 %v863, %v855
    %v893 = vpack.c.bf16 %v864, %v856
    %v894 = vpack.c.bf16 %v865, %v857
    %v895 = vpack.c.bf16 %v866, %v858
    %v896 = vpack.c.bf16 %v867, %v859
    %v897 = vpack.c.bf16 %v868, %v860
    %v898 = vpack.c.bf16 %v869, %v861
    %v899 = vpack.c.bf16 %v878, %v870
    %v900 = vpack.c.bf16 %v879, %v871
    %v901 = vpack.c.bf16 %v880, %v872
    %v902 = vpack.c.bf16 %v881, %v873
    %v903 = vpack.c.bf16 %v882, %v874
    %v904 = vpack.c.bf16 %v883, %v875
    %v905 = vpack.c.bf16 %v884, %v876
    %v906 = vpack.c.bf16 %v885, %v877
    %908 = vset.pattern.permute.xlu0 0
    %909 = vperm.xlu0 %908, %v34
    %v910 = vpop.permute.xlu0 %909
    %913 = vset.pattern.permute.xlu0 0
    %914 = vperm.xlu0 %913, %v35
    %v915 = vpop.permute.xlu0 %914
    %918 = vset.pattern.permute.xlu0 0
    %919 = vperm.xlu0 %918, %v36
    %v920 = vpop.permute.xlu0 %919
    %923 = vset.pattern.permute.xlu0 0
    %924 = vperm.xlu0 %923, %v37
    %v925 = vpop.permute.xlu0 %924
    %v931 = vunpack.c.l.b16 %v887
    %v932 = vunpack.c.l.b16 %v888
    %v933 = vunpack.c.l.b16 %v889
    %v934 = vunpack.c.l.b16 %v890
    %v935 = vpack.c.b16 %v932, %v931
    %v936 = vpack.c.b16 %v934, %v933
    %v938 = vsel %vm603, %v935, 0
    %v941 = vsel %vm603, %v936, 0
    %943 = vmatprep.subr.bf16.mxu0 %v892
    %944 = vmatpush1.bf16.msra.mxu0 %v891
    %945 = vmatprep.subr.bf16.mxu0 %v900
    %946 = vmatpush1.bf16.msra.mxu0 %v899
    %947 = vmatprep.subr.bf16.mxu0 0
    %948 = vmatpush1.bf16.msra.mxu0 0
    %949 = vmatprep.subr.bf16.mxu0 0
    %950 = vmatpush1.bf16.msra.mxu0 0
    %951 = vmatprep.subr.bf16.mxu0 0
    %952 = vmatpush1.bf16.msra.mxu0 0
    %953 = vmatprep.subr.bf16.mxu0 0
    %954 = vmatpush1.bf16.msra.mxu0 0
    %955 = vmatprep.subr.bf16.mxu0 0
    %956 = vmatpush1.bf16.msra.mxu0 0
    %957 = vmatprep.subr.bf16.mxu0 0
    %958 = vmatpush1.bf16.msra.mxu0 0
    %959 = vmatprep.subr.bf16.mxu0 0
    %960 = vmatpush1.bf16.msra.mxu0 0
    %961 = vmatprep.subr.bf16.mxu0 0
    %962 = vmatpush1.bf16.msra.mxu0 0
    %963 = vmatprep.subr.bf16.mxu0 0
    %964 = vmatpush1.bf16.msra.mxu0 0
    %965 = vmatprep.subr.bf16.mxu0 0
    %966 = vmatpush1.bf16.msra.mxu0 0
    %967 = vmatprep.subr.bf16.mxu0 0
    %968 = vmatpush1.bf16.msra.mxu0 0
    %969 = vmatprep.subr.bf16.mxu0 0
    %970 = vmatpush1.bf16.msra.mxu0 0
    %971 = vmatprep.subr.bf16.mxu0 0
    %972 = vmatpush1.bf16.msra.mxu0 0
    %973 = vmatprep.subr.bf16.mxu0 0
    %974 = vmatpush1.bf16.msra.mxu0 0
    %975 = vmatprep.mubr.bf16.mxu0 0
    %976 = vmatmul.mubr.bf16.gmra.mrb[0].mxu0 %v938
    %v977 = vpop.f32.mrb[0].mxu0
    %v978 = vadd.f32 %v910, %v977
    %v979 = vpop.f32.mrb[0].mxu0
    %v980 = vadd.f32 %v910, %v979
    %v981 = vpop.f32.mrb[0].mxu0
    %v982 = vadd.f32 %v915, %v981
    %v983 = vpop.f32.mrb[0].mxu0
    %v984 = vadd.f32 %v915, %v983
    %985 = vmatprep.mubr.bf16.mxu0 0
    %986 = vmatmul.mubr.bf16.gmra.mrb[0].mxu0 %v941
    %v987 = vpop.f32.mrb[0].mxu0
    %v988 = vadd.f32 %v920, %v987
    %v989 = vpop.f32.mrb[0].mxu0
    %v990 = vadd.f32 %v920, %v989
    %v991 = vpop.f32.mrb[0].mxu0
    %v992 = vadd.f32 %v925, %v991
    %v993 = vpop.f32.mrb[0].mxu0
    %v994 = vadd.f32 %v925, %v993
    %995 = vdwg.mxu0
    %996 = vmatprep.subr.bf16.mxu0 %v894
    %997 = vmatpush1.bf16.msra.mxu0 %v893
    %998 = vmatprep.subr.bf16.mxu0 %v902
    %999 = vmatpush1.bf16.msra.mxu0 %v901
    %1000 = vmatprep.subr.bf16.mxu0 0
    %1001 = vmatpush1.bf16.msra.mxu0 0
    %1002 = vmatprep.subr.bf16.mxu0 0
    %1003 = vmatpush1.bf16.msra.mxu0 0
    %1004 = vmatprep.subr.bf16.mxu0 0
    %1005 = vmatpush1.bf16.msra.mxu0 0
    %1006 = vmatprep.subr.bf16.mxu0 0
    %1007 = vmatpush1.bf16.msra.mxu0 0
    %1008 = vmatprep.subr.bf16.mxu0 0
    %1009 = vmatpush1.bf16.msra.mxu0 0
    %1010 = vmatprep.subr.bf16.mxu0 0
    %1011 = vmatpush1.bf16.msra.mxu0 0
    %1012 = vmatprep.subr.bf16.mxu0 0
    %1013 = vmatpush1.bf16.msra.mxu0 0
    %1014 = vmatprep.subr.bf16.mxu0 0
    %1015 = vmatpush1.bf16.msra.mxu0 0
    %1016 = vmatprep.subr.bf16.mxu0 0
    %1017 = vmatpush1.bf16.msra.mxu0 0
    %1018 = vmatprep.subr.bf16.mxu0 0
    %1019 = vmatpush1.bf16.msra.mxu0 0
    %1020 = vmatprep.subr.bf16.mxu0 0
    %1021 = vmatpush1.bf16.msra.mxu0 0
    %1022 = vmatprep.subr.bf16.mxu0 0
    %1023 = vmatpush1.bf16.msra.mxu0 0
    %1024 = vmatprep.subr.bf16.mxu0 0
    %1025 = vmatpush1.bf16.msra.mxu0 0
    %1026 = vmatprep.subr.bf16.mxu0 0
    %1027 = vmatpush1.bf16.msra.mxu0 0
    %1028 = vmatprep.mubr.bf16.mxu0 0
    %1029 = vmatmul.mubr.bf16.gmra.mrb[0].mxu0 %v938
    %v1030 = vpop.f32.mrb[0].mxu0
    %v1031 = vadd.f32 %v910, %v1030
    %v1032 = vpop.f32.mrb[0].mxu0
    %v1033 = vadd.f32 %v910, %v1032
    %v1034 = vpop.f32.mrb[0].mxu0
    %v1035 = vadd.f32 %v915, %v1034
    %v1036 = vpop.f32.mrb[0].mxu0
    %v1037 = vadd.f32 %v915, %v1036
    %1038 = vmatprep.mubr.bf16.mxu0 0
    %1039 = vmatmul.mubr.bf16.gmra.mrb[0].mxu0 %v941
    %v1040 = vpop.f32.mrb[0].mxu0
    %v1041 = vadd.f32 %v920, %v1040
    %v1042 = vpop.f32.mrb[0].mxu0
    %v1043 = vadd.f32 %v920, %v1042
    %v1044 = vpop.f32.mrb[0].mxu0
    %v1045 = vadd.f32 %v925, %v1044
    %v1046 = vpop.f32.mrb[0].mxu0
    %v1047 = vadd.f32 %v925, %v1046
    %1048 = vdwg.mxu0
    %1049 = vmatprep.subr.bf16.mxu0 %v896
    %1050 = vmatpush1.bf16.msra.mxu0 %v895
    %1051 = vmatprep.subr.bf16.mxu0 %v904
    %1052 = vmatpush1.bf16.msra.mxu0 %v903
    %1053 = vmatprep.subr.bf16.mxu0 0
    %1054 = vmatpush1.bf16.msra.mxu0 0
    %1055 = vmatprep.subr.bf16.mxu0 0
    %1056 = vmatpush1.bf16.msra.mxu0 0
    %1057 = vmatprep.subr.bf16.mxu0 0
    %1058 = vmatpush1.bf16.msra.mxu0 0
    %1059 = vmatprep.subr.bf16.mxu0 0
    %1060 = vmatpush1.bf16.msra.mxu0 0
    %1061 = vmatprep.subr.bf16.mxu0 0
    %1062 = vmatpush1.bf16.msra.mxu0 0
    %1063 = vmatprep.subr.bf16.mxu0 0
    %1064 = vmatpush1.bf16.msra.mxu0 0
    %1065 = vmatprep.subr.bf16.mxu0 0
    %1066 = vmatpush1.bf16.msra.mxu0 0
    %1067 = vmatprep.subr.bf16.mxu0 0
    %1068 = vmatpush1.bf16.msra.mxu0 0
    %1069 = vmatprep.subr.bf16.mxu0 0
    %1070 = vmatpush1.bf16.msra.mxu0 0
    %1071 = vmatprep.subr.bf16.mxu0 0
    %1072 = vmatpush1.bf16.msra.mxu0 0
    %1073 = vmatprep.subr.bf16.mxu0 0
    %1074 = vmatpush1.bf16.msra.mxu0 0
    %1075 = vmatprep.subr.bf16.mxu0 0
    %1076 = vmatpush1.bf16.msra.mxu0 0
    %1077 = vmatprep.subr.bf16.mxu0 0
    %1078 = vmatpush1.bf16.msra.mxu0 0
    %1079 = vmatprep.subr.bf16.mxu0 0
    %1080 = vmatpush1.bf16.msra.mxu0 0
    %1081 = vmatprep.mubr.bf16.mxu0 0
    %1082 = vmatmul.mubr.bf16.gmra.mrb[0].mxu0 %v938
    %v1083 = vpop.f32.mrb[0].mxu0
    %v1084 = vadd.f32 %v910, %v1083
    %v1085 = vpop.f32.mrb[0].mxu0
    %v1086 = vadd.f32 %v910, %v1085
    %v1087 = vpop.f32.mrb[0].mxu0
    %v1088 = vadd.f32 %v915, %v1087
    %v1089 = vpop.f32.mrb[0].mxu0
    %v1090 = vadd.f32 %v915, %v1089
    %1091 = vmatprep.mubr.bf16.mxu0 0
    %1092 = vmatmul.mubr.bf16.gmra.mrb[0].mxu0 %v941
    %v1093 = vpop.f32.mrb[0].mxu0
    %v1094 = vadd.f32 %v920, %v1093
    %v1095 = vpop.f32.mrb[0].mxu0
    %v1096 = vadd.f32 %v920, %v1095
    %v1097 = vpop.f32.mrb[0].mxu0
    %v1098 = vadd.f32 %v925, %v1097
    %v1099 = vpop.f32.mrb[0].mxu0
    %v1100 = vadd.f32 %v925, %v1099
    %1101 = vdwg.mxu0
    %1102 = vmatprep.subr.bf16.mxu0 %v898
    %1103 = vmatpush1.bf16.msra.mxu0 %v897
    %1104 = vmatprep.subr.bf16.mxu0 %v906
    %1105 = vmatpush1.bf16.msra.mxu0 %v905
    %1106 = vmatprep.subr.bf16.mxu0 0
    %1107 = vmatpush1.bf16.msra.mxu0 0
    %1108 = vmatprep.subr.bf16.mxu0 0
    %1109 = vmatpush1.bf16.msra.mxu0 0
    %1110 = vmatprep.subr.bf16.mxu0 0
    %1111 = vmatpush1.bf16.msra.mxu0 0
    %1112 = vmatprep.subr.bf16.mxu0 0
    %1113 = vmatpush1.bf16.msra.mxu0 0
    %1114 = vmatprep.subr.bf16.mxu0 0
    %1115 = vmatpush1.bf16.msra.mxu0 0
    %1116 = vmatprep.subr.bf16.mxu0 0
    %1117 = vmatpush1.bf16.msra.mxu0 0
    %1118 = vmatprep.subr.bf16.mxu0 0
    %1119 = vmatpush1.bf16.msra.mxu0 0
    %1120 = vmatprep.subr.bf16.mxu0 0
    %1121 = vmatpush1.bf16.msra.mxu0 0
    %1122 = vmatprep.subr.bf16.mxu0 0
    %1123 = vmatpush1.bf16.msra.mxu0 0
    %1124 = vmatprep.subr.bf16.mxu0 0
    %1125 = vmatpush1.bf16.msra.mxu0 0
    %1126 = vmatprep.subr.bf16.mxu0 0
    %1127 = vmatpush1.bf16.msra.mxu0 0
    %1128 = vmatprep.subr.bf16.mxu0 0
    %1129 = vmatpush1.bf16.msra.mxu0 0
    %1130 = vmatprep.subr.bf16.mxu0 0
    %1131 = vmatpush1.bf16.msra.mxu0 0
    %1132 = vmatprep.subr.bf16.mxu0 0
    %1133 = vmatpush1.bf16.msra.mxu0 0
    %1134 = vmatprep.mubr.bf16.mxu0 0
    %1135 = vmatmul.mubr.bf16.gmra.mrb[0].mxu0 %v938
    %v1136 = vpop.f32.mrb[0].mxu0
    %v1137 = vadd.f32 %v910, %v1136
    %v1138 = vpop.f32.mrb[0].mxu0
    %v1139 = vadd.f32 %v910, %v1138
    %v1140 = vpop.f32.mrb[0].mxu0
    %v1141 = vadd.f32 %v915, %v1140
    %v1142 = vpop.f32.mrb[0].mxu0
    %v1143 = vadd.f32 %v915, %v1142
    %1144 = vmatprep.mubr.bf16.mxu0 0
    %1145 = vmatmul.mubr.bf16.gmra.mrb[0].mxu0 %v941
    %v1146 = vpop.f32.mrb[0].mxu0
    %v1147 = vadd.f32 %v920, %v1146
    %v1148 = vpop.f32.mrb[0].mxu0
    %v1149 = vadd.f32 %v920, %v1148
    %v1150 = vpop.f32.mrb[0].mxu0
    %v1151 = vadd.f32 %v925, %v1150
    %v1152 = vpop.f32.mrb[0].mxu0
    %v1153 = vadd.f32 %v925, %v1152
    %1154 = vdwg.mxu0
    %v1155 = vtanh.pop %v978
    %v1156 = vtanh.pop %v980
    %v1157 = vtanh.pop %v1031
    %v1158 = vtanh.pop %v1033
    %v1159 = vtanh.pop %v1084
    %v1160 = vtanh.pop %v1086
    %v1161 = vtanh.pop %v1137
    %v1162 = vtanh.pop %v1139
    %v1163 = vtanh.pop %v982
    %v1164 = vtanh.pop %v984
    %v1165 = vtanh.pop %v1035
    %v1166 = vtanh.pop %v1037
    %v1167 = vtanh.pop %v1088
    %v1168 = vtanh.pop %v1090
    %v1169 = vtanh.pop %v1141
    %v1170 = vtanh.pop %v1143
    %v1171 = vtanh.pop %v988
    %v1172 = vtanh.pop %v990
    %v1173 = vtanh.pop %v1041
    %v1174 = vtanh.pop %v1043
    %v1175 = vtanh.pop %v1094
    %v1176 = vtanh.pop %v1096
    %v1177 = vtanh.pop %v1147
    %v1178 = vtanh.pop %v1149
    %v1179 = vtanh.pop %v992
    %v1180 = vtanh.pop %v994
    %v1181 = vtanh.pop %v1045
    %v1182 = vtanh.pop %v1047
    %v1183 = vtanh.pop %v1098
    %v1184 = vtanh.pop %v1100
    %v1185 = vtanh.pop %v1151
    %v1186 = vtanh.pop %v1153
    %s1187 = scalar_lea.vmem %s2, 32
    %v1188 = vld [vmem:[%s1187] sm:$0xf]
    %v1189 = vld [vmem:[%s1187 + $0x4] sm:$0xf]
    %v1190 = vld [vmem:[%s1187 + $0x8] sm:$0xf]
    %v1191 = vld [vmem:[%s1187 + $0xc] sm:$0xf]
    %v1192 = vpack.c.bf16 %v1163, %v1155
    %v1193 = vpack.c.bf16 %v1164, %v1156
    %v1194 = vpack.c.bf16 %v1165, %v1157
    %v1195 = vpack.c.bf16 %v1166, %v1158
    %v1196 = vpack.c.bf16 %v1167, %v1159
    %v1197 = vpack.c.bf16 %v1168, %v1160
    %v1198 = vpack.c.bf16 %v1169, %v1161
    %v1199 = vpack.c.bf16 %v1170, %v1162
    %v1200 = vpack.c.bf16 %v1179, %v1171
    %v1201 = vpack.c.bf16 %v1180, %v1172
    %v1202 = vpack.c.bf16 %v1181, %v1173
    %v1203 = vpack.c.bf16 %v1182, %v1174
    %v1204 = vpack.c.bf16 %v1183, %v1175
    %v1205 = vpack.c.bf16 %v1184, %v1176
    %v1206 = vpack.c.bf16 %v1185, %v1177
    %v1207 = vpack.c.bf16 %v1186, %v1178
    %1209 = vset.pattern.permute.xlu0 0
    %1210 = vperm.xlu0 %1209, %v39
    %v1211 = vpop.permute.xlu0 %1210
    %1214 = vset.pattern.permute.xlu0 0
    %1215 = vperm.xlu0 %1214, %v40
    %v1216 = vpop.permute.xlu0 %1215
    %1219 = vset.pattern.permute.xlu0 0
    %1220 = vperm.xlu0 %1219, %v41
    %v1221 = vpop.permute.xlu0 %1220
    %1224 = vset.pattern.permute.xlu0 0
    %1225 = vperm.xlu0 %1224, %v42
    %v1226 = vpop.permute.xlu0 %1225
    %v1232 = vunpack.c.l.b16 %v1188
    %v1233 = vunpack.c.l.b16 %v1189
    %v1234 = vunpack.c.l.b16 %v1190
    %v1235 = vunpack.c.l.b16 %v1191
    %v1236 = vpack.c.b16 %v1233, %v1232
    %v1237 = vpack.c.b16 %v1235, %v1234
    %v1239 = vsel %vm603, %v1236, 0
    %v1242 = vsel %vm603, %v1237, 0
    %1244 = vmatprep.subr.bf16.mxu0 %v1193
    %1245 = vmatpush1.bf16.msra.mxu0 %v1192
    %1246 = vmatprep.subr.bf16.mxu0 %v1201
    %1247 = vmatpush1.bf16.msra.mxu0 %v1200
    %1248 = vmatprep.subr.bf16.mxu0 0
    %1249 = vmatpush1.bf16.msra.mxu0 0
    %1250 = vmatprep.subr.bf16.mxu0 0
    %1251 = vmatpush1.bf16.msra.mxu0 0
    %1252 = vmatprep.subr.bf16.mxu0 0
    %1253 = vmatpush1.bf16.msra.mxu0 0
    %1254 = vmatprep.subr.bf16.mxu0 0
    %1255 = vmatpush1.bf16.msra.mxu0 0
    %1256 = vmatprep.subr.bf16.mxu0 0
    %1257 = vmatpush1.bf16.msra.mxu0 0
    %1258 = vmatprep.subr.bf16.mxu0 0
    %1259 = vmatpush1.bf16.msra.mxu0 0
    %1260 = vmatprep.subr.bf16.mxu0 0
    %1261 = vmatpush1.bf16.msra.mxu0 0
    %1262 = vmatprep.subr.bf16.mxu0 0
    %1263 = vmatpush1.bf16.msra.mxu0 0
    %1264 = vmatprep.subr.bf16.mxu0 0
    %1265 = vmatpush1.bf16.msra.mxu0 0
    %1266 = vmatprep.subr.bf16.mxu0 0
    %1267 = vmatpush1.bf16.msra.mxu0 0
    %1268 = vmatprep.subr.bf16.mxu0 0
    %1269 = vmatpush1.bf16.msra.mxu0 0
    %1270 = vmatprep.subr.bf16.mxu0 0
    %1271 = vmatpush1.bf16.msra.mxu0 0
    %1272 = vmatprep.subr.bf16.mxu0 0
    %1273 = vmatpush1.bf16.msra.mxu0 0
    %1274 = vmatprep.subr.bf16.mxu0 0
    %1275 = vmatpush1.bf16.msra.mxu0 0
    %1276 = vmatprep.mubr.bf16.mxu0 0
    %1277 = vmatmul.mubr.bf16.gmra.mrb[0].mxu0 %v1239
    %v1278 = vpop.f32.mrb[0].mxu0
    %v1279 = vadd.f32 %v1211, %v1278
    %v1280 = vpop.f32.mrb[0].mxu0
    %v1281 = vadd.f32 %v1211, %v1280
    %v1282 = vpop.f32.mrb[0].mxu0
    %v1283 = vadd.f32 %v1216, %v1282
    %v1284 = vpop.f32.mrb[0].mxu0
    %v1285 = vadd.f32 %v1216, %v1284
    %1286 = vmatprep.mubr.bf16.mxu0 0
    %1287 = vmatmul.mubr.bf16.gmra.mrb[0].mxu0 %v1242
    %v1288 = vpop.f32.mrb[0].mxu0
    %v1289 = vadd.f32 %v1221, %v1288
    %v1290 = vpop.f32.mrb[0].mxu0
    %v1291 = vadd.f32 %v1221, %v1290
    %v1292 = vpop.f32.mrb[0].mxu0
    %v1293 = vadd.f32 %v1226, %v1292
    %v1294 = vpop.f32.mrb[0].mxu0
    %v1295 = vadd.f32 %v1226, %v1294
    %1296 = vdwg.mxu0
    %1297 = vmatprep.subr.bf16.mxu0 %v1195
    %1298 = vmatpush1.bf16.msra.mxu0 %v1194
    %1299 = vmatprep.subr.bf16.mxu0 %v1203
    %1300 = vmatpush1.bf16.msra.mxu0 %v1202
    %1301 = vmatprep.subr.bf16.mxu0 0
    %1302 = vmatpush1.bf16.msra.mxu0 0
    %1303 = vmatprep.subr.bf16.mxu0 0
    %1304 = vmatpush1.bf16.msra.mxu0 0
    %1305 = vmatprep.subr.bf16.mxu0 0
    %1306 = vmatpush1.bf16.msra.mxu0 0
    %1307 = vmatprep.subr.bf16.mxu0 0
    %1308 = vmatpush1.bf16.msra.mxu0 0
    %1309 = vmatprep.subr.bf16.mxu0 0
    %1310 = vmatpush1.bf16.msra.mxu0 0
    %1311 = vmatprep.subr.bf16.mxu0 0
    %1312 = vmatpush1.bf16.msra.mxu0 0
    %1313 = vmatprep.subr.bf16.mxu0 0
    %1314 = vmatpush1.bf16.msra.mxu0 0
    %1315 = vmatprep.subr.bf16.mxu0 0
    %1316 = vmatpush1.bf16.msra.mxu0 0
    %1317 = vmatprep.subr.bf16.mxu0 0
    %1318 = vmatpush1.bf16.msra.mxu0 0
    %1319 = vmatprep.subr.bf16.mxu0 0
    %1320 = vmatpush1.bf16.msra.mxu0 0
    %1321 = vmatprep.subr.bf16.mxu0 0
    %1322 = vmatpush1.bf16.msra.mxu0 0
    %1323 = vmatprep.subr.bf16.mxu0 0
    %1324 = vmatpush1.bf16.msra.mxu0 0
    %1325 = vmatprep.subr.bf16.mxu0 0
    %1326 = vmatpush1.bf16.msra.mxu0 0
    %1327 = vmatprep.subr.bf16.mxu0 0
    %1328 = vmatpush1.bf16.msra.mxu0 0
    %1329 = vmatprep.mubr.bf16.mxu0 0
    %1330 = vmatmul.mubr.bf16.gmra.mrb[0].mxu0 %v1239
    %v1331 = vpop.f32.mrb[0].mxu0
    %v1332 = vadd.f32 %v1211, %v1331
    %v1333 = vpop.f32.mrb[0].mxu0
    %v1334 = vadd.f32 %v1211, %v1333
    %v1335 = vpop.f32.mrb[0].mxu0
    %v1336 = vadd.f32 %v1216, %v1335
    %v1337 = vpop.f32.mrb[0].mxu0
    %v1338 = vadd.f32 %v1216, %v1337
    %1339 = vmatprep.mubr.bf16.mxu0 0
    %1340 = vmatmul.mubr.bf16.gmra.mrb[0].mxu0 %v1242
    %v1341 = vpop.f32.mrb[0].mxu0
    %v1342 = vadd.f32 %v1221, %v1341
    %v1343 = vpop.f32.mrb[0].mxu0
    %v1344 = vadd.f32 %v1221, %v1343
    %v1345 = vpop.f32.mrb[0].mxu0
    %v1346 = vadd.f32 %v1226, %v1345
    %v1347 = vpop.f32.mrb[0].mxu0
    %v1348 = vadd.f32 %v1226, %v1347
    %1349 = vdwg.mxu0
    %1350 = vmatprep.subr.bf16.mxu0 %v1197
    %1351 = vmatpush1.bf16.msra.mxu0 %v1196
    %1352 = vmatprep.subr.bf16.mxu0 %v1205
    %1353 = vmatpush1.bf16.msra.mxu0 %v1204
    %1354 = vmatprep.subr.bf16.mxu0 0
    %1355 = vmatpush1.bf16.msra.mxu0 0
    %1356 = vmatprep.subr.bf16.mxu0 0
    %1357 = vmatpush1.bf16.msra.mxu0 0
    %1358 = vmatprep.subr.bf16.mxu0 0
    %1359 = vmatpush1.bf16.msra.mxu0 0
    %1360 = vmatprep.subr.bf16.mxu0 0
    %1361 = vmatpush1.bf16.msra.mxu0 0
    %1362 = vmatprep.subr.bf16.mxu0 0
    %1363 = vmatpush1.bf16.msra.mxu0 0
    %1364 = vmatprep.subr.bf16.mxu0 0
    %1365 = vmatpush1.bf16.msra.mxu0 0
    %1366 = vmatprep.subr.bf16.mxu0 0
    %1367 = vmatpush1.bf16.msra.mxu0 0
    %1368 = vmatprep.subr.bf16.mxu0 0
    %1369 = vmatpush1.bf16.msra.mxu0 0
    %1370 = vmatprep.subr.bf16.mxu0 0
    %1371 = vmatpush1.bf16.msra.mxu0 0
    %1372 = vmatprep.subr.bf16.mxu0 0
    %1373 = vmatpush1.bf16.msra.mxu0 0
    %1374 = vmatprep.subr.bf16.mxu0 0
    %1375 = vmatpush1.bf16.msra.mxu0 0
    %1376 = vmatprep.subr.bf16.mxu0 0
    %1377 = vmatpush1.bf16.msra.mxu0 0
    %1378 = vmatprep.subr.bf16.mxu0 0
    %1379 = vmatpush1.bf16.msra.mxu0 0
    %1380 = vmatprep.subr.bf16.mxu0 0
    %1381 = vmatpush1.bf16.msra.mxu0 0
    %1382 = vmatprep.mubr.bf16.mxu0 0
    %1383 = vmatmul.mubr.bf16.gmra.mrb[0].mxu0 %v1239
    %v1384 = vpop.f32.mrb[0].mxu0
    %v1385 = vadd.f32 %v1211, %v1384
    %v1386 = vpop.f32.mrb[0].mxu0
    %v1387 = vadd.f32 %v1211, %v1386
    %v1388 = vpop.f32.mrb[0].mxu0
    %v1389 = vadd.f32 %v1216, %v1388
    %v1390 = vpop.f32.mrb[0].mxu0
    %v1391 = vadd.f32 %v1216, %v1390
    %1392 = vmatprep.mubr.bf16.mxu0 0
    %1393 = vmatmul.mubr.bf16.gmra.mrb[0].mxu0 %v1242
    %v1394 = vpop.f32.mrb[0].mxu0
    %v1395 = vadd.f32 %v1221, %v1394
    %v1396 = vpop.f32.mrb[0].mxu0
    %v1397 = vadd.f32 %v1221, %v1396
    %v1398 = vpop.f32.mrb[0].mxu0
    %v1399 = vadd.f32 %v1226, %v1398
    %v1400 = vpop.f32.mrb[0].mxu0
    %v1401 = vadd.f32 %v1226, %v1400
    %1402 = vdwg.mxu0
    %1403 = vmatprep.subr.bf16.mxu0 %v1199
    %1404 = vmatpush1.bf16.msra.mxu0 %v1198
    %1405 = vmatprep.subr.bf16.mxu0 %v1207
    %1406 = vmatpush1.bf16.msra.mxu0 %v1206
    %1407 = vmatprep.subr.bf16.mxu0 0
    %1408 = vmatpush1.bf16.msra.mxu0 0
    %1409 = vmatprep.subr.bf16.mxu0 0
    %1410 = vmatpush1.bf16.msra.mxu0 0
    %1411 = vmatprep.subr.bf16.mxu0 0
    %1412 = vmatpush1.bf16.msra.mxu0 0
    %1413 = vmatprep.subr.bf16.mxu0 0
    %1414 = vmatpush1.bf16.msra.mxu0 0
    %1415 = vmatprep.subr.bf16.mxu0 0
    %1416 = vmatpush1.bf16.msra.mxu0 0
    %1417 = vmatprep.subr.bf16.mxu0 0
    %1418 = vmatpush1.bf16.msra.mxu0 0
    %1419 = vmatprep.subr.bf16.mxu0 0
    %1420 = vmatpush1.bf16.msra.mxu0 0
    %1421 = vmatprep.subr.bf16.mxu0 0
    %1422 = vmatpush1.bf16.msra.mxu0 0
    %1423 = vmatprep.subr.bf16.mxu0 0
    %1424 = vmatpush1.bf16.msra.mxu0 0
    %1425 = vmatprep.subr.bf16.mxu0 0
    %1426 = vmatpush1.bf16.msra.mxu0 0
    %1427 = vmatprep.subr.bf16.mxu0 0
    %1428 = vmatpush1.bf16.msra.mxu0 0
    %1429 = vmatprep.subr.bf16.mxu0 0
    %1430 = vmatpush1.bf16.msra.mxu0 0
    %1431 = vmatprep.subr.bf16.mxu0 0
    %1432 = vmatpush1.bf16.msra.mxu0 0
    %1433 = vmatprep.subr.bf16.mxu0 0
    %1434 = vmatpush1.bf16.msra.mxu0 0
    %1435 = vmatprep.mubr.bf16.mxu0 0
    %1436 = vmatmul.mubr.bf16.gmra.mrb[0].mxu0 %v1239
    %v1437 = vpop.f32.mrb[0].mxu0
    %v1438 = vadd.f32 %v1211, %v1437
    %v1439 = vpop.f32.mrb[0].mxu0
    %v1440 = vadd.f32 %v1211, %v1439
    %v1441 = vpop.f32.mrb[0].mxu0
    %v1442 = vadd.f32 %v1216, %v1441
    %v1443 = vpop.f32.mrb[0].mxu0
    %v1444 = vadd.f32 %v1216, %v1443
    %1445 = vmatprep.mubr.bf16.mxu0 0
    %1446 = vmatmul.mubr.bf16.gmra.mrb[0].mxu0 %v1242
    %v1447 = vpop.f32.mrb[0].mxu0
    %v1448 = vadd.f32 %v1221, %v1447
    %v1449 = vpop.f32.mrb[0].mxu0
    %v1450 = vadd.f32 %v1221, %v1449
    %v1451 = vpop.f32.mrb[0].mxu0
    %v1452 = vadd.f32 %v1226, %v1451
    %v1453 = vpop.f32.mrb[0].mxu0
    %v1454 = vadd.f32 %v1226, %v1453
    %1455 = vdwg.mxu0
    %v1456 = vtanh.pop %v1279
    %v1457 = vtanh.pop %v1281
    %v1458 = vtanh.pop %v1332
    %v1459 = vtanh.pop %v1334
    %v1460 = vtanh.pop %v1385
    %v1461 = vtanh.pop %v1387
    %v1462 = vtanh.pop %v1438
    %v1463 = vtanh.pop %v1440
    %v1464 = vtanh.pop %v1283
    %v1465 = vtanh.pop %v1285
    %v1466 = vtanh.pop %v1336
    %v1467 = vtanh.pop %v1338
    %v1468 = vtanh.pop %v1389
    %v1469 = vtanh.pop %v1391
    %v1470 = vtanh.pop %v1442
    %v1471 = vtanh.pop %v1444
    %v1472 = vtanh.pop %v1289
    %v1473 = vtanh.pop %v1291
    %v1474 = vtanh.pop %v1342
    %v1475 = vtanh.pop %v1344
    %v1476 = vtanh.pop %v1395
    %v1477 = vtanh.pop %v1397
    %v1478 = vtanh.pop %v1448
    %v1479 = vtanh.pop %v1450
    %v1480 = vtanh.pop %v1293
    %v1481 = vtanh.pop %v1295
    %v1482 = vtanh.pop %v1346
    %v1483 = vtanh.pop %v1348
    %v1484 = vtanh.pop %v1399
    %v1485 = vtanh.pop %v1401
    %v1486 = vtanh.pop %v1452
    %v1487 = vtanh.pop %v1454
    %v1488 = vadd.f32 %v1456, %v854
    %v1489 = vadd.f32 %v1457, %v855
    %v1490 = vadd.f32 %v1458, %v856
    %v1491 = vadd.f32 %v1459, %v857
    %v1492 = vadd.f32 %v1460, %v858
    %v1493 = vadd.f32 %v1461, %v859
    %v1494 = vadd.f32 %v1462, %v860
    %v1495 = vadd.f32 %v1463, %v861
    %v1496 = vadd.f32 %v1464, %v862
    %v1497 = vadd.f32 %v1465, %v863
    %v1498 = vadd.f32 %v1466, %v864
    %v1499 = vadd.f32 %v1467, %v865
    %v1500 = vadd.f32 %v1468, %v866
    %v1501 = vadd.f32 %v1469, %v867
    %v1502 = vadd.f32 %v1470, %v868
    %v1503 = vadd.f32 %v1471, %v869
    %v1504 = vadd.f32 %v1472, %v870
    %v1505 = vadd.f32 %v1473, %v871
    %v1506 = vadd.f32 %v1474, %v872
    %v1507 = vadd.f32 %v1475, %v873
    %v1508 = vadd.f32 %v1476, %v874
    %v1509 = vadd.f32 %v1477, %v875
    %v1510 = vadd.f32 %v1478, %v876
    %v1511 = vadd.f32 %v1479, %v877
    %v1512 = vadd.f32 %v1480, %v878
    %v1513 = vadd.f32 %v1481, %v879
    %v1514 = vadd.f32 %v1482, %v880
    %v1515 = vadd.f32 %v1483, %v881
    %v1516 = vadd.f32 %v1484, %v882
    %v1517 = vadd.f32 %v1485, %v883
    %v1518 = vadd.f32 %v1486, %v884
    %v1519 = vadd.f32 %v1487, %v885
    %s1520 = scalar_lea.vmem %s2, 48
    %v1521 = vld [vmem:[%s1520] sm:$0xf]
    %v1522 = vld [vmem:[%s1520 + $0x4] sm:$0xf]
    %v1523 = vld [vmem:[%s1520 + $0x8] sm:$0xf]
    %v1524 = vld [vmem:[%s1520 + $0xc] sm:$0xf]
    %v1525 = vpack.c.bf16 %v1496, %v1488
    %v1526 = vpack.c.bf16 %v1497, %v1489
    %v1527 = vpack.c.bf16 %v1498, %v1490
    %v1528 = vpack.c.bf16 %v1499, %v1491
    %v1529 = vpack.c.bf16 %v1500, %v1492
    %v1530 = vpack.c.bf16 %v1501, %v1493
    %v1531 = vpack.c.bf16 %v1502, %v1494
    %v1532 = vpack.c.bf16 %v1503, %v1495
    %v1533 = vpack.c.bf16 %v1512, %v1504
    %v1534 = vpack.c.bf16 %v1513, %v1505
    %v1535 = vpack.c.bf16 %v1514, %v1506
    %v1536 = vpack.c.bf16 %v1515, %v1507
    %v1537 = vpack.c.bf16 %v1516, %v1508
    %v1538 = vpack.c.bf16 %v1517, %v1509
    %v1539 = vpack.c.bf16 %v1518, %v1510
    %v1540 = vpack.c.bf16 %v1519, %v1511
    %1542 = vset.pattern.permute.xlu0 0
    %1543 = vperm.xlu0 %1542, %v44
    %v1544 = vpop.permute.xlu0 %1543
    %1547 = vset.pattern.permute.xlu0 0
    %1548 = vperm.xlu0 %1547, %v45
    %v1549 = vpop.permute.xlu0 %1548
    %1552 = vset.pattern.permute.xlu0 0
    %1553 = vperm.xlu0 %1552, %v46
    %v1554 = vpop.permute.xlu0 %1553
    %1557 = vset.pattern.permute.xlu0 0
    %1558 = vperm.xlu0 %1557, %v47
    %v1559 = vpop.permute.xlu0 %1558
    %v1565 = vunpack.c.l.b16 %v1521
    %v1566 = vunpack.c.l.b16 %v1522
    %v1567 = vunpack.c.l.b16 %v1523
    %v1568 = vunpack.c.l.b16 %v1524
    %v1569 = vpack.c.b16 %v1566, %v1565
    %v1570 = vpack.c.b16 %v1568, %v1567
    %v1572 = vsel %vm603, %v1569, 0
    %v1575 = vsel %vm603, %v1570, 0
    %1577 = vmatprep.subr.bf16.mxu0 %v1526
    %1578 = vmatpush1.bf16.msra.mxu0 %v1525
    %1579 = vmatprep.subr.bf16.mxu0 %v1534
    %1580 = vmatpush1.bf16.msra.mxu0 %v1533
    %1581 = vmatprep.subr.bf16.mxu0 0
    %1582 = vmatpush1.bf16.msra.mxu0 0
    %1583 = vmatprep.subr.bf16.mxu0 0
    %1584 = vmatpush1.bf16.msra.mxu0 0
    %1585 = vmatprep.subr.bf16.mxu0 0
    %1586 = vmatpush1.bf16.msra.mxu0 0
    %1587 = vmatprep.subr.bf16.mxu0 0
    %1588 = vmatpush1.bf16.msra.mxu0 0
    %1589 = vmatprep.subr.bf16.mxu0 0
    %1590 = vmatpush1.bf16.msra.mxu0 0
    %1591 = vmatprep.subr.bf16.mxu0 0
    %1592 = vmatpush1.bf16.msra.mxu0 0
    %1593 = vmatprep.subr.bf16.mxu0 0
    %1594 = vmatpush1.bf16.msra.mxu0 0
    %1595 = vmatprep.subr.bf16.mxu0 0
    %1596 = vmatpush1.bf16.msra.mxu0 0
    %1597 = vmatprep.subr.bf16.mxu0 0
    %1598 = vmatpush1.bf16.msra.mxu0 0
    %1599 = vmatprep.subr.bf16.mxu0 0
    %1600 = vmatpush1.bf16.msra.mxu0 0
    %1601 = vmatprep.subr.bf16.mxu0 0
    %1602 = vmatpush1.bf16.msra.mxu0 0
    %1603 = vmatprep.subr.bf16.mxu0 0
    %1604 = vmatpush1.bf16.msra.mxu0 0
    %1605 = vmatprep.subr.bf16.mxu0 0
    %1606 = vmatpush1.bf16.msra.mxu0 0
    %1607 = vmatprep.subr.bf16.mxu0 0
    %1608 = vmatpush1.bf16.msra.mxu0 0
    %1609 = vmatprep.mubr.bf16.mxu0 0
    %1610 = vmatmul.mubr.bf16.gmra.mrb[0].mxu0 %v1572
    %v1611 = vpop.f32.mrb[0].mxu0
    %v1612 = vadd.f32 %v1544, %v1611
    %v1613 = vpop.f32.mrb[0].mxu0
    %v1614 = vadd.f32 %v1544, %v1613
    %v1615 = vpop.f32.mrb[0].mxu0
    %v1616 = vadd.f32 %v1549, %v1615
    %v1617 = vpop.f32.mrb[0].mxu0
    %v1618 = vadd.f32 %v1549, %v1617
    %1619 = vmatprep.mubr.bf16.mxu0 0
    %1620 = vmatmul.mubr.bf16.gmra.mrb[0].mxu0 %v1575
    %v1621 = vpop.f32.mrb[0].mxu0
    %v1622 = vadd.f32 %v1554, %v1621
    %v1623 = vpop.f32.mrb[0].mxu0
    %v1624 = vadd.f32 %v1554, %v1623
    %v1625 = vpop.f32.mrb[0].mxu0
    %v1626 = vadd.f32 %v1559, %v1625
    %v1627 = vpop.f32.mrb[0].mxu0
    %v1628 = vadd.f32 %v1559, %v1627
    %1629 = vdwg.mxu0
    %1630 = vmatprep.subr.bf16.mxu0 %v1528
    %1631 = vmatpush1.bf16.msra.mxu0 %v1527
    %1632 = vmatprep.subr.bf16.mxu0 %v1536
    %1633 = vmatpush1.bf16.msra.mxu0 %v1535
    %1634 = vmatprep.subr.bf16.mxu0 0
    %1635 = vmatpush1.bf16.msra.mxu0 0
    %1636 = vmatprep.subr.bf16.mxu0 0
    %1637 = vmatpush1.bf16.msra.mxu0 0
    %1638 = vmatprep.subr.bf16.mxu0 0
    %1639 = vmatpush1.bf16.msra.mxu0 0
    %1640 = vmatprep.subr.bf16.mxu0 0
    %1641 = vmatpush1.bf16.msra.mxu0 0
    %1642 = vmatprep.subr.bf16.mxu0 0
    %1643 = vmatpush1.bf16.msra.mxu0 0
    %1644 = vmatprep.subr.bf16.mxu0 0
    %1645 = vmatpush1.bf16.msra.mxu0 0
    %1646 = vmatprep.subr.bf16.mxu0 0
    %1647 = vmatpush1.bf16.msra.mxu0 0
    %1648 = vmatprep.subr.bf16.mxu0 0
    %1649 = vmatpush1.bf16.msra.mxu0 0
    %1650 = vmatprep.subr.bf16.mxu0 0
    %1651 = vmatpush1.bf16.msra.mxu0 0
    %1652 = vmatprep.subr.bf16.mxu0 0
    %1653 = vmatpush1.bf16.msra.mxu0 0
    %1654 = vmatprep.subr.bf16.mxu0 0
    %1655 = vmatpush1.bf16.msra.mxu0 0
    %1656 = vmatprep.subr.bf16.mxu0 0
    %1657 = vmatpush1.bf16.msra.mxu0 0
    %1658 = vmatprep.subr.bf16.mxu0 0
    %1659 = vmatpush1.bf16.msra.mxu0 0
    %1660 = vmatprep.subr.bf16.mxu0 0
    %1661 = vmatpush1.bf16.msra.mxu0 0
    %1662 = vmatprep.mubr.bf16.mxu0 0
    %1663 = vmatmul.mubr.bf16.gmra.mrb[0].mxu0 %v1572
    %v1664 = vpop.f32.mrb[0].mxu0
    %v1665 = vadd.f32 %v1544, %v1664
    %v1666 = vpop.f32.mrb[0].mxu0
    %v1667 = vadd.f32 %v1544, %v1666
    %v1668 = vpop.f32.mrb[0].mxu0
    %v1669 = vadd.f32 %v1549, %v1668
    %v1670 = vpop.f32.mrb[0].mxu0
    %v1671 = vadd.f32 %v1549, %v1670
    %1672 = vmatprep.mubr.bf16.mxu0 0
    %1673 = vmatmul.mubr.bf16.gmra.mrb[0].mxu0 %v1575
    %v1674 = vpop.f32.mrb[0].mxu0
    %v1675 = vadd.f32 %v1554, %v1674
    %v1676 = vpop.f32.mrb[0].mxu0
    %v1677 = vadd.f32 %v1554, %v1676
    %v1678 = vpop.f32.mrb[0].mxu0
    %v1679 = vadd.f32 %v1559, %v1678
    %v1680 = vpop.f32.mrb[0].mxu0
    %v1681 = vadd.f32 %v1559, %v1680
    %1682 = vdwg.mxu0
    %1683 = vmatprep.subr.bf16.mxu0 %v1530
    %1684 = vmatpush1.bf16.msra.mxu0 %v1529
    %1685 = vmatprep.subr.bf16.mxu0 %v1538
    %1686 = vmatpush1.bf16.msra.mxu0 %v1537
    %1687 = vmatprep.subr.bf16.mxu0 0
    %1688 = vmatpush1.bf16.msra.mxu0 0
    %1689 = vmatprep.subr.bf16.mxu0 0
    %1690 = vmatpush1.bf16.msra.mxu0 0
    %1691 = vmatprep.subr.bf16.mxu0 0
    %1692 = vmatpush1.bf16.msra.mxu0 0
    %1693 = vmatprep.subr.bf16.mxu0 0
    %1694 = vmatpush1.bf16.msra.mxu0 0
    %1695 = vmatprep.subr.bf16.mxu0 0
    %1696 = vmatpush1.bf16.msra.mxu0 0
    %1697 = vmatprep.subr.bf16.mxu0 0
    %1698 = vmatpush1.bf16.msra.mxu0 0
    %1699 = vmatprep.subr.bf16.mxu0 0
    %1700 = vmatpush1.bf16.msra.mxu0 0
    %1701 = vmatprep.subr.bf16.mxu0 0
    %1702 = vmatpush1.bf16.msra.mxu0 0
    %1703 = vmatprep.subr.bf16.mxu0 0
    %1704 = vmatpush1.bf16.msra.mxu0 0
    %1705 = vmatprep.subr.bf16.mxu0 0
    %1706 = vmatpush1.bf16.msra.mxu0 0
    %1707 = vmatprep.subr.bf16.mxu0 0
    %1708 = vmatpush1.bf16.msra.mxu0 0
    %1709 = vmatprep.subr.bf16.mxu0 0
    %1710 = vmatpush1.bf16.msra.mxu0 0
    %1711 = vmatprep.subr.bf16.mxu0 0
    %1712 = vmatpush1.bf16.msra.mxu0 0
    %1713 = vmatprep.subr.bf16.mxu0 0
    %1714 = vmatpush1.bf16.msra.mxu0 0
    %1715 = vmatprep.mubr.bf16.mxu0 0
    %1716 = vmatmul.mubr.bf16.gmra.mrb[0].mxu0 %v1572
    %v1717 = vpop.f32.mrb[0].mxu0
    %v1718 = vadd.f32 %v1544, %v1717
    %v1719 = vpop.f32.mrb[0].mxu0
    %v1720 = vadd.f32 %v1544, %v1719
    %v1721 = vpop.f32.mrb[0].mxu0
    %v1722 = vadd.f32 %v1549, %v1721
    %v1723 = vpop.f32.mrb[0].mxu0
    %v1724 = vadd.f32 %v1549, %v1723
    %1725 = vmatprep.mubr.bf16.mxu0 0
    %1726 = vmatmul.mubr.bf16.gmra.mrb[0].mxu0 %v1575
    %v1727 = vpop.f32.mrb[0].mxu0
    %v1728 = vadd.f32 %v1554, %v1727
    %v1729 = vpop.f32.mrb[0].mxu0
    %v1730 = vadd.f32 %v1554, %v1729
    %v1731 = vpop.f32.mrb[0].mxu0
    %v1732 = vadd.f32 %v1559, %v1731
    %v1733 = vpop.f32.mrb[0].mxu0
    %v1734 = vadd.f32 %v1559, %v1733
    %1735 = vdwg.mxu0
    %1736 = vmatprep.subr.bf16.mxu0 %v1532
    %1737 = vmatpush1.bf16.msra.mxu0 %v1531
    %1738 = vmatprep.subr.bf16.mxu0 %v1540
    %1739 = vmatpush1.bf16.msra.mxu0 %v1539
    %1740 = vmatprep.subr.bf16.mxu0 0
    %1741 = vmatpush1.bf16.msra.mxu0 0
    %1742 = vmatprep.subr.bf16.mxu0 0
    %1743 = vmatpush1.bf16.msra.mxu0 0
    %1744 = vmatprep.subr.bf16.mxu0 0
    %1745 = vmatpush1.bf16.msra.mxu0 0
    %1746 = vmatprep.subr.bf16.mxu0 0
    %1747 = vmatpush1.bf16.msra.mxu0 0
    %1748 = vmatprep.subr.bf16.mxu0 0
    %1749 = vmatpush1.bf16.msra.mxu0 0
    %1750 = vmatprep.subr.bf16.mxu0 0
    %1751 = vmatpush1.bf16.msra.mxu0 0
    %1752 = vmatprep.subr.bf16.mxu0 0
    %1753 = vmatpush1.bf16.msra.mxu0 0
    %1754 = vmatprep.subr.bf16.mxu0 0
    %1755 = vmatpush1.bf16.msra.mxu0 0
    %1756 = vmatprep.subr.bf16.mxu0 0
    %1757 = vmatpush1.bf16.msra.mxu0 0
    %1758 = vmatprep.subr.bf16.mxu0 0
    %1759 = vmatpush1.bf16.msra.mxu0 0
    %1760 = vmatprep.subr.bf16.mxu0 0
    %1761 = vmatpush1.bf16.msra.mxu0 0
    %1762 = vmatprep.subr.bf16.mxu0 0
    %1763 = vmatpush1.bf16.msra.mxu0 0
    %1764 = vmatprep.subr.bf16.mxu0 0
    %1765 = vmatpush1.bf16.msra.mxu0 0
    %1766 = vmatprep.subr.bf16.mxu0 0
    %1767 = vmatpush1.bf16.msra.mxu0 0
    %1768 = vmatprep.mubr.bf16.mxu0 0
    %1769 = vmatmul.mubr.bf16.gmra.mrb[0].mxu0 %v1572
    %v1770 = vpop.f32.mrb[0].mxu0
    %v1771 = vadd.f32 %v1544, %v1770
    %v1772 = vpop.f32.mrb[0].mxu0
    %v1773 = vadd.f32 %v1544, %v1772
    %v1774 = vpop.f32.mrb[0].mxu0
    %v1775 = vadd.f32 %v1549, %v1774
    %v1776 = vpop.f32.mrb[0].mxu0
    %v1777 = vadd.f32 %v1549, %v1776
    %1778 = vmatprep.mubr.bf16.mxu0 0
    %1779 = vmatmul.mubr.bf16.gmra.mrb[0].mxu0 %v1575
    %v1780 = vpop.f32.mrb[0].mxu0
    %v1781 = vadd.f32 %v1554, %v1780
    %v1782 = vpop.f32.mrb[0].mxu0
    %v1783 = vadd.f32 %v1554, %v1782
    %v1784 = vpop.f32.mrb[0].mxu0
    %v1785 = vadd.f32 %v1559, %v1784
    %v1786 = vpop.f32.mrb[0].mxu0
    %v1787 = vadd.f32 %v1559, %v1786
    %1788 = vdwg.mxu0
    %v1789 = vtanh.pop %v1612
    %v1790 = vtanh.pop %v1614
    %v1791 = vtanh.pop %v1665
    %v1792 = vtanh.pop %v1667
    %v1793 = vtanh.pop %v1718
    %v1794 = vtanh.pop %v1720
    %v1795 = vtanh.pop %v1771
    %v1796 = vtanh.pop %v1773
    %v1797 = vtanh.pop %v1616
    %v1798 = vtanh.pop %v1618
    %v1799 = vtanh.pop %v1669
    %v1800 = vtanh.pop %v1671
    %v1801 = vtanh.pop %v1722
    %v1802 = vtanh.pop %v1724
    %v1803 = vtanh.pop %v1775
    %v1804 = vtanh.pop %v1777
    %v1805 = vtanh.pop %v1622
    %v1806 = vtanh.pop %v1624
    %v1807 = vtanh.pop %v1675
    %v1808 = vtanh.pop %v1677
    %v1809 = vtanh.pop %v1728
    %v1810 = vtanh.pop %v1730
    %v1811 = vtanh.pop %v1781
    %v1812 = vtanh.pop %v1783
    %v1813 = vtanh.pop %v1626
    %v1814 = vtanh.pop %v1628
    %v1815 = vtanh.pop %v1679
    %v1816 = vtanh.pop %v1681
    %v1817 = vtanh.pop %v1732
    %v1818 = vtanh.pop %v1734
    %v1819 = vtanh.pop %v1785
    %v1820 = vtanh.pop %v1787
    %s1821 = scalar_lea.vmem %s2, 64
    %v1822 = vld [vmem:[%s1821] sm:$0xf]
    %v1823 = vld [vmem:[%s1821 + $0x4] sm:$0xf]
    %v1824 = vld [vmem:[%s1821 + $0x8] sm:$0xf]
    %v1825 = vld [vmem:[%s1821 + $0xc] sm:$0xf]
    %v1826 = vpack.c.bf16 %v1797, %v1789
    %v1827 = vpack.c.bf16 %v1798, %v1790
    %v1828 = vpack.c.bf16 %v1799, %v1791
    %v1829 = vpack.c.bf16 %v1800, %v1792
    %v1830 = vpack.c.bf16 %v1801, %v1793
    %v1831 = vpack.c.bf16 %v1802, %v1794
    %v1832 = vpack.c.bf16 %v1803, %v1795
    %v1833 = vpack.c.bf16 %v1804, %v1796
    %v1834 = vpack.c.bf16 %v1813, %v1805
    %v1835 = vpack.c.bf16 %v1814, %v1806
    %v1836 = vpack.c.bf16 %v1815, %v1807
    %v1837 = vpack.c.bf16 %v1816, %v1808
    %v1838 = vpack.c.bf16 %v1817, %v1809
    %v1839 = vpack.c.bf16 %v1818, %v1810
    %v1840 = vpack.c.bf16 %v1819, %v1811
    %v1841 = vpack.c.bf16 %v1820, %v1812
    %1843 = vset.pattern.permute.xlu0 0
    %1844 = vperm.xlu0 %1843, %v49
    %v1845 = vpop.permute.xlu0 %1844
    %1848 = vset.pattern.permute.xlu0 0
    %1849 = vperm.xlu0 %1848, %v50
    %v1850 = vpop.permute.xlu0 %1849
    %1853 = vset.pattern.permute.xlu0 0
    %1854 = vperm.xlu0 %1853, %v51
    %v1855 = vpop.permute.xlu0 %1854
    %1858 = vset.pattern.permute.xlu0 0
    %1859 = vperm.xlu0 %1858, %v52
    %v1860 = vpop.permute.xlu0 %1859
    %v1866 = vunpack.c.l.b16 %v1822
    %v1867 = vunpack.c.l.b16 %v1823
    %v1868 = vunpack.c.l.b16 %v1824
    %v1869 = vunpack.c.l.b16 %v1825
    %v1870 = vpack.c.b16 %v1867, %v1866
    %v1871 = vpack.c.b16 %v1869, %v1868
    %v1873 = vsel %vm603, %v1870, 0
    %v1876 = vsel %vm603, %v1871, 0
    %1878 = vmatprep.subr.bf16.mxu0 %v1827
    %1879 = vmatpush1.bf16.msra.mxu0 %v1826
    %1880 = vmatprep.subr.bf16.mxu0 %v1835
    %1881 = vmatpush1.bf16.msra.mxu0 %v1834
    %1882 = vmatprep.subr.bf16.mxu0 0
    %1883 = vmatpush1.bf16.msra.mxu0 0
    %1884 = vmatprep.subr.bf16.mxu0 0
    %1885 = vmatpush1.bf16.msra.mxu0 0
    %1886 = vmatprep.subr.bf16.mxu0 0
    %1887 = vmatpush1.bf16.msra.mxu0 0
    %1888 = vmatprep.subr.bf16.mxu0 0
    %1889 = vmatpush1.bf16.msra.mxu0 0
    %1890 = vmatprep.subr.bf16.mxu0 0
    %1891 = vmatpush1.bf16.msra.mxu0 0
    %1892 = vmatprep.subr.bf16.mxu0 0
    %1893 = vmatpush1.bf16.msra.mxu0 0
    %1894 = vmatprep.subr.bf16.mxu0 0
    %1895 = vmatpush1.bf16.msra.mxu0 0
    %1896 = vmatprep.subr.bf16.mxu0 0
    %1897 = vmatpush1.bf16.msra.mxu0 0
    %1898 = vmatprep.subr.bf16.mxu0 0
    %1899 = vmatpush1.bf16.msra.mxu0 0
    %1900 = vmatprep.subr.bf16.mxu0 0
    %1901 = vmatpush1.bf16.msra.mxu0 0
    %1902 = vmatprep.subr.bf16.mxu0 0
    %1903 = vmatpush1.bf16.msra.mxu0 0
    %1904 = vmatprep.subr.bf16.mxu0 0
    %1905 = vmatpush1.bf16.msra.mxu0 0
    %1906 = vmatprep.subr.bf16.mxu0 0
    %1907 = vmatpush1.bf16.msra.mxu0 0
    %1908 = vmatprep.subr.bf16.mxu0 0
    %1909 = vmatpush1.bf16.msra.mxu0 0
    %1910 = vmatprep.mubr.bf16.mxu0 0
    %1911 = vmatmul.mubr.bf16.gmra.mrb[0].mxu0 %v1873
    %v1912 = vpop.f32.mrb[0].mxu0
    %v1913 = vadd.f32 %v1845, %v1912
    %v1914 = vpop.f32.mrb[0].mxu0
    %v1915 = vadd.f32 %v1845, %v1914
    %v1916 = vpop.f32.mrb[0].mxu0
    %v1917 = vadd.f32 %v1850, %v1916
    %v1918 = vpop.f32.mrb[0].mxu0
    %v1919 = vadd.f32 %v1850, %v1918
    %1920 = vmatprep.mubr.bf16.mxu0 0
    %1921 = vmatmul.mubr.bf16.gmra.mrb[0].mxu0 %v1876
    %v1922 = vpop.f32.mrb[0].mxu0
    %v1923 = vadd.f32 %v1855, %v1922
    %v1924 = vpop.f32.mrb[0].mxu0
    %v1925 = vadd.f32 %v1855, %v1924
    %v1926 = vpop.f32.mrb[0].mxu0
    %v1927 = vadd.f32 %v1860, %v1926
    %v1928 = vpop.f32.mrb[0].mxu0
    %v1929 = vadd.f32 %v1860, %v1928
    %1930 = vdwg.mxu0
    %1931 = vmatprep.subr.bf16.mxu0 %v1829
    %1932 = vmatpush1.bf16.msra.mxu0 %v1828
    %1933 = vmatprep.subr.bf16.mxu0 %v1837
    %1934 = vmatpush1.bf16.msra.mxu0 %v1836
    %1935 = vmatprep.subr.bf16.mxu0 0
    %1936 = vmatpush1.bf16.msra.mxu0 0
    %1937 = vmatprep.subr.bf16.mxu0 0
    %1938 = vmatpush1.bf16.msra.mxu0 0
    %1939 = vmatprep.subr.bf16.mxu0 0
    %1940 = vmatpush1.bf16.msra.mxu0 0
    %1941 = vmatprep.subr.bf16.mxu0 0
    %1942 = vmatpush1.bf16.msra.mxu0 0
    %1943 = vmatprep.subr.bf16.mxu0 0
    %1944 = vmatpush1.bf16.msra.mxu0 0
    %1945 = vmatprep.subr.bf16.mxu0 0
    %1946 = vmatpush1.bf16.msra.mxu0 0
    %1947 = vmatprep.subr.bf16.mxu0 0
    %1948 = vmatpush1.bf16.msra.mxu0 0
    %1949 = vmatprep.subr.bf16.mxu0 0
    %1950 = vmatpush1.bf16.msra.mxu0 0
    %1951 = vmatprep.subr.bf16.mxu0 0
    %1952 = vmatpush1.bf16.msra.mxu0 0
    %1953 = vmatprep.subr.bf16.mxu0 0
    %1954 = vmatpush1.bf16.msra.mxu0 0
    %1955 = vmatprep.subr.bf16.mxu0 0
    %1956 = vmatpush1.bf16.msra.mxu0 0
    %1957 = vmatprep.subr.bf16.mxu0 0
    %1958 = vmatpush1.bf16.msra.mxu0 0
    %1959 = vmatprep.subr.bf16.mxu0 0
    %1960 = vmatpush1.bf16.msra.mxu0 0
    %1961 = vmatprep.subr.bf16.mxu0 0
    %1962 = vmatpush1.bf16.msra.mxu0 0
    %1963 = vmatprep.mubr.bf16.mxu0 0
    %1964 = vmatmul.mubr.bf16.gmra.mrb[0].mxu0 %v1873
    %v1965 = vpop.f32.mrb[0].mxu0
    %v1966 = vadd.f32 %v1845, %v1965
    %v1967 = vpop.f32.mrb[0].mxu0
    %v1968 = vadd.f32 %v1845, %v1967
    %v1969 = vpop.f32.mrb[0].mxu0
    %v1970 = vadd.f32 %v1850, %v1969
    %v1971 = vpop.f32.mrb[0].mxu0
    %v1972 = vadd.f32 %v1850, %v1971
    %1973 = vmatprep.mubr.bf16.mxu0 0
    %1974 = vmatmul.mubr.bf16.gmra.mrb[0].mxu0 %v1876
    %v1975 = vpop.f32.mrb[0].mxu0
    %v1976 = vadd.f32 %v1855, %v1975
    %v1977 = vpop.f32.mrb[0].mxu0
    %v1978 = vadd.f32 %v1855, %v1977
    %v1979 = vpop.f32.mrb[0].mxu0
    %v1980 = vadd.f32 %v1860, %v1979
    %v1981 = vpop.f32.mrb[0].mxu0
    %v1982 = vadd.f32 %v1860, %v1981
    %1983 = vdwg.mxu0
    %1984 = vmatprep.subr.bf16.mxu0 %v1831
    %1985 = vmatpush1.bf16.msra.mxu0 %v1830
    %1986 = vmatprep.subr.bf16.mxu0 %v1839
    %1987 = vmatpush1.bf16.msra.mxu0 %v1838
    %1988 = vmatprep.subr.bf16.mxu0 0
    %1989 = vmatpush1.bf16.msra.mxu0 0
    %1990 = vmatprep.subr.bf16.mxu0 0
    %1991 = vmatpush1.bf16.msra.mxu0 0
    %1992 = vmatprep.subr.bf16.mxu0 0
    %1993 = vmatpush1.bf16.msra.mxu0 0
    %1994 = vmatprep.subr.bf16.mxu0 0
    %1995 = vmatpush1.bf16.msra.mxu0 0
    %1996 = vmatprep.subr.bf16.mxu0 0
    %1997 = vmatpush1.bf16.msra.mxu0 0
    %1998 = vmatprep.subr.bf16.mxu0 0
    %1999 = vmatpush1.bf16.msra.mxu0 0
    %2000 = vmatprep.subr.bf16.mxu0 0
    %2001 = vmatpush1.bf16.msra.mxu0 0
    %2002 = vmatprep.subr.bf16.mxu0 0
    %2003 = vmatpush1.bf16.msra.mxu0 0
    %2004 = vmatprep.subr.bf16.mxu0 0
    %2005 = vmatpush1.bf16.msra.mxu0 0
    %2006 = vmatprep.subr.bf16.mxu0 0
    %2007 = vmatpush1.bf16.msra.mxu0 0
    %2008 = vmatprep.subr.bf16.mxu0 0
    %2009 = vmatpush1.bf16.msra.mxu0 0
    %2010 = vmatprep.subr.bf16.mxu0 0
    %2011 = vmatpush1.bf16.msra.mxu0 0
    %2012 = vmatprep.subr.bf16.mxu0 0
    %2013 = vmatpush1.bf16.msra.mxu0 0
    %2014 = vmatprep.subr.bf16.mxu0 0
    %2015 = vmatpush1.bf16.msra.mxu0 0
    %2016 = vmatprep.mubr.bf16.mxu0 0
    %2017 = vmatmul.mubr.bf16.gmra.mrb[0].mxu0 %v1873
    %v2018 = vpop.f32.mrb[0].mxu0
    %v2019 = vadd.f32 %v1845, %v2018
    %v2020 = vpop.f32.mrb[0].mxu0
    %v2021 = vadd.f32 %v1845, %v2020
    %v2022 = vpop.f32.mrb[0].mxu0
    %v2023 = vadd.f32 %v1850, %v2022
    %v2024 = vpop.f32.mrb[0].mxu0
    %v2025 = vadd.f32 %v1850, %v2024
    %2026 = vmatprep.mubr.bf16.mxu0 0
    %2027 = vmatmul.mubr.bf16.gmra.mrb[0].mxu0 %v1876
    %v2028 = vpop.f32.mrb[0].mxu0
    %v2029 = vadd.f32 %v1855, %v2028
    %v2030 = vpop.f32.mrb[0].mxu0
    %v2031 = vadd.f32 %v1855, %v2030
    %v2032 = vpop.f32.mrb[0].mxu0
    %v2033 = vadd.f32 %v1860, %v2032
    %v2034 = vpop.f32.mrb[0].mxu0
    %v2035 = vadd.f32 %v1860, %v2034
    %2036 = vdwg.mxu0
    %2037 = vmatprep.subr.bf16.mxu0 %v1833
    %2038 = vmatpush1.bf16.msra.mxu0 %v1832
    %2039 = vmatprep.subr.bf16.mxu0 %v1841
    %2040 = vmatpush1.bf16.msra.mxu0 %v1840
    %2041 = vmatprep.subr.bf16.mxu0 0
    %2042 = vmatpush1.bf16.msra.mxu0 0
    %2043 = vmatprep.subr.bf16.mxu0 0
    %2044 = vmatpush1.bf16.msra.mxu0 0
    %2045 = vmatprep.subr.bf16.mxu0 0
    %2046 = vmatpush1.bf16.msra.mxu0 0
    %2047 = vmatprep.subr.bf16.mxu0 0
    %2048 = vmatpush1.bf16.msra.mxu0 0
    %2049 = vmatprep.subr.bf16.mxu0 0
    %2050 = vmatpush1.bf16.msra.mxu0 0
    %2051 = vmatprep.subr.bf16.mxu0 0
    %2052 = vmatpush1.bf16.msra.mxu0 0
    %2053 = vmatprep.subr.bf16.mxu0 0
    %2054 = vmatpush1.bf16.msra.mxu0 0
    %2055 = vmatprep.subr.bf16.mxu0 0
    %2056 = vmatpush1.bf16.msra.mxu0 0
    %2057 = vmatprep.subr.bf16.mxu0 0
    %2058 = vmatpush1.bf16.msra.mxu0 0
    %2059 = vmatprep.subr.bf16.mxu0 0
    %2060 = vmatpush1.bf16.msra.mxu0 0
    %2061 = vmatprep.subr.bf16.mxu0 0
    %2062 = vmatpush1.bf16.msra.mxu0 0
    %2063 = vmatprep.subr.bf16.mxu0 0
    %2064 = vmatpush1.bf16.msra.mxu0 0
    %2065 = vmatprep.subr.bf16.mxu0 0
    %2066 = vmatpush1.bf16.msra.mxu0 0
    %2067 = vmatprep.subr.bf16.mxu0 0
    %2068 = vmatpush1.bf16.msra.mxu0 0
    %2069 = vmatprep.mubr.bf16.mxu0 0
    %2070 = vmatmul.mubr.bf16.gmra.mrb[0].mxu0 %v1873
    %v2071 = vpop.f32.mrb[0].mxu0
    %v2072 = vadd.f32 %v1845, %v2071
    %v2073 = vpop.f32.mrb[0].mxu0
    %v2074 = vadd.f32 %v1845, %v2073
    %v2075 = vpop.f32.mrb[0].mxu0
    %v2076 = vadd.f32 %v1850, %v2075
    %v2077 = vpop.f32.mrb[0].mxu0
    %v2078 = vadd.f32 %v1850, %v2077
    %2079 = vmatprep.mubr.bf16.mxu0 0
    %2080 = vmatmul.mubr.bf16.gmra.mrb[0].mxu0 %v1876
    %v2081 = vpop.f32.mrb[0].mxu0
    %v2082 = vadd.f32 %v1855, %v2081
    %v2083 = vpop.f32.mrb[0].mxu0
    %v2084 = vadd.f32 %v1855, %v2083
    %v2085 = vpop.f32.mrb[0].mxu0
    %v2086 = vadd.f32 %v1860, %v2085
    %v2087 = vpop.f32.mrb[0].mxu0
    %v2088 = vadd.f32 %v1860, %v2087
    %2089 = vdwg.mxu0
    %v2090 = vtanh.pop %v1913
    %v2091 = vtanh.pop %v1915
    %v2092 = vtanh.pop %v1966
    %v2093 = vtanh.pop %v1968
    %v2094 = vtanh.pop %v2019
    %v2095 = vtanh.pop %v2021
    %v2096 = vtanh.pop %v2072
    %v2097 = vtanh.pop %v2074
    %v2098 = vtanh.pop %v1917
    %v2099 = vtanh.pop %v1919
    %v2100 = vtanh.pop %v1970
    %v2101 = vtanh.pop %v1972
    %v2102 = vtanh.pop %v2023
    %v2103 = vtanh.pop %v2025
    %v2104 = vtanh.pop %v2076
    %v2105 = vtanh.pop %v2078
    %v2106 = vtanh.pop %v1923
    %v2107 = vtanh.pop %v1925
    %v2108 = vtanh.pop %v1976
    %v2109 = vtanh.pop %v1978
    %v2110 = vtanh.pop %v2029
    %v2111 = vtanh.pop %v2031
    %v2112 = vtanh.pop %v2082
    %v2113 = vtanh.pop %v2084
    %v2114 = vtanh.pop %v1927
    %v2115 = vtanh.pop %v1929
    %v2116 = vtanh.pop %v1980
    %v2117 = vtanh.pop %v1982
    %v2118 = vtanh.pop %v2033
    %v2119 = vtanh.pop %v2035
    %v2120 = vtanh.pop %v2086
    %v2121 = vtanh.pop %v2088
    %v2122 = vadd.f32 %v2090, %v1488
    %v2123 = vadd.f32 %v2091, %v1489
    %v2124 = vadd.f32 %v2092, %v1490
    %v2125 = vadd.f32 %v2093, %v1491
    %v2126 = vadd.f32 %v2094, %v1492
    %v2127 = vadd.f32 %v2095, %v1493
    %v2128 = vadd.f32 %v2096, %v1494
    %v2129 = vadd.f32 %v2097, %v1495
    %v2130 = vadd.f32 %v2098, %v1496
    %v2131 = vadd.f32 %v2099, %v1497
    %v2132 = vadd.f32 %v2100, %v1498
    %v2133 = vadd.f32 %v2101, %v1499
    %v2134 = vadd.f32 %v2102, %v1500
    %v2135 = vadd.f32 %v2103, %v1501
    %v2136 = vadd.f32 %v2104, %v1502
    %v2137 = vadd.f32 %v2105, %v1503
    %v2138 = vadd.f32 %v2106, %v1504
    %v2139 = vadd.f32 %v2107, %v1505
    %v2140 = vadd.f32 %v2108, %v1506
    %v2141 = vadd.f32 %v2109, %v1507
    %v2142 = vadd.f32 %v2110, %v1508
    %v2143 = vadd.f32 %v2111, %v1509
    %v2144 = vadd.f32 %v2112, %v1510
    %v2145 = vadd.f32 %v2113, %v1511
    %v2146 = vadd.f32 %v2114, %v1512
    %v2147 = vadd.f32 %v2115, %v1513
    %v2148 = vadd.f32 %v2116, %v1514
    %v2149 = vadd.f32 %v2117, %v1515
    %v2150 = vadd.f32 %v2118, %v1516
    %v2151 = vadd.f32 %v2119, %v1517
    %v2152 = vadd.f32 %v2120, %v1518
    %v2153 = vadd.f32 %v2121, %v1519
    %v2154 = vld [vmem:[%s4] sm:$0xff]
    %v2155 = vld [vmem:[%s4 + $0x8] sm:$0xff]
    %v2156 = vld [vmem:[%s4 + $0x10] sm:$0xff]
    %v2157 = vld [vmem:[%s4 + $0x18] sm:$0xff]
    %2159 = vset.pattern.permute.xlu0 0
    %2160 = vperm.xlu0 %2159, %v2154
    %v2161 = vpop.permute.xlu0 %2160
    %2164 = vset.pattern.permute.xlu0 0
    %2165 = vperm.xlu0 %2164, %v2155
    %v2166 = vpop.permute.xlu0 %2165
    %2169 = vset.pattern.permute.xlu0 0
    %2170 = vperm.xlu0 %2169, %v2156
    %v2171 = vpop.permute.xlu0 %2170
    %2174 = vset.pattern.permute.xlu0 0
    %2175 = vperm.xlu0 %2174, %v2157
    %v2176 = vpop.permute.xlu0 %2175
    %v2178 = vmul.f32 %v2122, %v2161
    %v2179 = vmul.f32 %v2123, %v2161
    %v2180 = vmul.f32 %v2124, %v2161
    %v2181 = vmul.f32 %v2125, %v2161
    %v2182 = vmul.f32 %v2126, %v2161
    %v2183 = vmul.f32 %v2127, %v2161
    %v2184 = vmul.f32 %v2128, %v2161
    %v2185 = vmul.f32 %v2129, %v2161
    %v2186 = vmul.f32 %v2130, %v2166
    %v2187 = vmul.f32 %v2131, %v2166
    %v2188 = vmul.f32 %v2132, %v2166
    %v2189 = vmul.f32 %v2133, %v2166
    %v2190 = vmul.f32 %v2134, %v2166
    %v2191 = vmul.f32 %v2135, %v2166
    %v2192 = vmul.f32 %v2136, %v2166
    %v2193 = vmul.f32 %v2137, %v2166
    %v2194 = vmul.f32 %v2138, %v2171
    %v2195 = vmul.f32 %v2139, %v2171
    %v2196 = vmul.f32 %v2140, %v2171
    %v2197 = vmul.f32 %v2141, %v2171
    %v2198 = vmul.f32 %v2142, %v2171
    %v2199 = vmul.f32 %v2143, %v2171
    %v2200 = vmul.f32 %v2144, %v2171
    %v2201 = vmul.f32 %v2145, %v2171
    %v2202 = vmul.f32 %v2146, %v2176
    %v2203 = vmul.f32 %v2147, %v2176
    %v2204 = vmul.f32 %v2148, %v2176
    %v2205 = vmul.f32 %v2149, %v2176
    %v2206 = vmul.f32 %v2150, %v2176
    %v2207 = vmul.f32 %v2151, %v2176
    %v2208 = vmul.f32 %v2152, %v2176
    %v2209 = vmul.f32 %v2153, %v2176
    %v2210 = vadd.f32 %v2178, %v2186
    %v2211 = vadd.f32 %v2210, %v2194
    %v2212 = vadd.f32 %v2211, %v2202
    %v2213 = vrot.slane %v2212, 4
    %v2214 = vadd.f32 %v2212, %v2213
    %v2215 = vrot.slane %v2214, 2
    %v2216 = vadd.f32 %v2214, %v2215
    %v2217 = vrot.slane %v2216, 1
    %v2218 = vadd.f32 %v2216, %v2217
    %v2219 = vadd.f32 %v2179, %v2187
    %v2220 = vadd.f32 %v2219, %v2195
    %v2221 = vadd.f32 %v2220, %v2203
    %v2222 = vrot.slane %v2221, 4
    %v2223 = vadd.f32 %v2221, %v2222
    %v2224 = vrot.slane %v2223, 2
    %v2225 = vadd.f32 %v2223, %v2224
    %v2226 = vrot.slane %v2225, 1
    %v2227 = vadd.f32 %v2225, %v2226
    %v2228 = vadd.f32 %v2180, %v2188
    %v2229 = vadd.f32 %v2228, %v2196
    %v2230 = vadd.f32 %v2229, %v2204
    %v2231 = vrot.slane %v2230, 4
    %v2232 = vadd.f32 %v2230, %v2231
    %v2233 = vrot.slane %v2232, 2
    %v2234 = vadd.f32 %v2232, %v2233
    %v2235 = vrot.slane %v2234, 1
    %v2236 = vadd.f32 %v2234, %v2235
    %v2237 = vadd.f32 %v2181, %v2189
    %v2238 = vadd.f32 %v2237, %v2197
    %v2239 = vadd.f32 %v2238, %v2205
    %v2240 = vrot.slane %v2239, 4
    %v2241 = vadd.f32 %v2239, %v2240
    %v2242 = vrot.slane %v2241, 2
    %v2243 = vadd.f32 %v2241, %v2242
    %v2244 = vrot.slane %v2243, 1
    %v2245 = vadd.f32 %v2243, %v2244
    %v2246 = vadd.f32 %v2182, %v2190
    %v2247 = vadd.f32 %v2246, %v2198
    %v2248 = vadd.f32 %v2247, %v2206
    %v2249 = vrot.slane %v2248, 4
    %v2250 = vadd.f32 %v2248, %v2249
    %v2251 = vrot.slane %v2250, 2
    %v2252 = vadd.f32 %v2250, %v2251
    %v2253 = vrot.slane %v2252, 1
    %v2254 = vadd.f32 %v2252, %v2253
    %v2255 = vadd.f32 %v2183, %v2191
    %v2256 = vadd.f32 %v2255, %v2199
    %v2257 = vadd.f32 %v2256, %v2207
    %v2258 = vrot.slane %v2257, 4
    %v2259 = vadd.f32 %v2257, %v2258
    %v2260 = vrot.slane %v2259, 2
    %v2261 = vadd.f32 %v2259, %v2260
    %v2262 = vrot.slane %v2261, 1
    %v2263 = vadd.f32 %v2261, %v2262
    %v2264 = vadd.f32 %v2184, %v2192
    %v2265 = vadd.f32 %v2264, %v2200
    %v2266 = vadd.f32 %v2265, %v2208
    %v2267 = vrot.slane %v2266, 4
    %v2268 = vadd.f32 %v2266, %v2267
    %v2269 = vrot.slane %v2268, 2
    %v2270 = vadd.f32 %v2268, %v2269
    %v2271 = vrot.slane %v2270, 1
    %v2272 = vadd.f32 %v2270, %v2271
    %v2273 = vadd.f32 %v2185, %v2193
    %v2274 = vadd.f32 %v2273, %v2201
    %v2275 = vadd.f32 %v2274, %v2209
    %v2276 = vrot.slane %v2275, 4
    %v2277 = vadd.f32 %v2275, %v2276
    %v2278 = vrot.slane %v2277, 2
    %v2279 = vadd.f32 %v2277, %v2278
    %v2280 = vrot.slane %v2279, 1
    %v2281 = vadd.f32 %v2279, %v2280
    %v2290 = vcombine.low %v2218, %v2227
    %v2291 = vcombine.low %v2236, %v2245
    %v2292 = vcombine.low %v2254, %v2263
    %v2293 = vcombine.low %v2272, %v2281
    %v2295 = vunpack.c.l.s4 1966171168
    %v2296 = vunpack.c.0.s8 %v2295
    %v2297 = vlaneseq
    %v2298 = vshrl.u32 %v2297, 7
    %v2299 = vsub.s32 %v2296, %v2298
    %v2300 = vrot.slane %v2290, %v2299
    %v2302 = vunpack.c.l.s4 1966171168
    %v2303 = vunpack.c.0.s8 %v2302
    %v2304 = vlaneseq
    %v2305 = vshrl.u32 %v2304, 7
    %v2306 = vsub.s32 %v2303, %v2305
    %v2307 = vrot.slane %v2291, %v2306
    %v2309 = vunpack.c.l.s4 1966171168
    %v2310 = vunpack.c.0.s8 %v2309
    %v2311 = vlaneseq
    %v2312 = vshrl.u32 %v2311, 7
    %v2313 = vsub.s32 %v2310, %v2312
    %v2314 = vrot.slane %v2292, %v2313
    %v2316 = vunpack.c.l.s4 1966171168
    %v2317 = vunpack.c.0.s8 %v2316
    %v2318 = vlaneseq
    %v2319 = vshrl.u32 %v2318, 7
    %v2320 = vsub.s32 %v2317, %v2319
    %v2321 = vrot.slane %v2293, %v2320
    %v2322 = vcombine.low %v2300, %v2307
    %v2323 = vcombine.low %v2314, %v2321
    %v2325 = vunpack.c.l.s4 1966171168
    %v2326 = vunpack.c.0.s8 %v2325
    %v2327 = vlaneseq
    %v2328 = vshrl.u32 %v2327, 7
    %v2329 = vsub.s32 %v2326, %v2328
    %v2330 = vrot.slane %v2322, %v2329
    %v2332 = vunpack.c.l.s4 1966171168
    %v2333 = vunpack.c.0.s8 %v2332
    %v2334 = vlaneseq
    %v2335 = vshrl.u32 %v2334, 7
    %v2336 = vsub.s32 %v2333, %v2335
    %v2337 = vrot.slane %v2323, %v2336
    %v2338 = vcombine.low %v2330, %v2337
    %2340 = vst [vmem:[#allocation2] sm:$0xff] %v2338
    // Predicated region
    $region22: #{_forward_jit.1} parent=1 // pred_check
      _
    $region23: #{_forward_jit.1} parent=1 // pred_check_branch
      %2342 = sbr.rel (0) target = $region25
    $region24: #{_forward_jit.1} parent=1 // pred_region
      %s2344 = ssub.s32 128, 128
      %2345 = vsyncadd [#allocation3], %s2344
      %s2347 = sshll.u32 [#allocation2], 4
      %s2348 = int_to_ptr.vmem [resolvable:$true] %s2347
      %2350 = dma.vmem_to_hbm [thread:$0]  %s2348, 128, %s5, [#allocation3]
    $region25: #{_forward_jit.1} parent=1 // pred_fallthru
      _
    // Predicated region
    $region26: #{_forward_jit.1} parent=1 // pred_check
      _
    $region27: #{_forward_jit.1} parent=1 // pred_check_branch
      %2352 = sbr.rel (0) target = $region29
    $region28: #{_forward_jit.1} parent=1 // pred_region
      %2353 = dma.done [#allocation3], 128
    $region29: #{_forward_jit.1} parent=1 // pred_fallthru
      _
    %2354 = vsyncpa [#allocation3], 1

</llo_original>
